<compile_context>
chip_gen: v7x
topology: tpu7x:2x2x1
jax: 0.10.0
libtpu: 0.0.40
codegen_flags: <defaults>
</compile_context>

<pallas_src>
import jax
import jax.numpy as jnp
from jax import lax
from jax.experimental import pallas as pl
from jax.experimental.pallas import tpu as pltpu

# ----- module hyper-parameters (globals in the PyTorch file) -----
CONTROL_PLANE_DIM = 64
STATE_DIM = 128          # global `state_dim` used by out_proj
WINDOW_SIZE = 128        # global `window_size` used by out_proj
INPUT_DIM = 16           # RNN input size (argument `input_dim`)

MAX_BATCH_TILE = 128     # cap on batch rows per grid step (MXU M-dim)
MAX_FRAME_CHUNK = 512    # cap on frames per grid step along the serial frame axis
VMEM_CHUNK_BUDGET = 24 * 1024 * 1024  # budget for frame-chunk-sized VMEM buffers


def _round_up(x, m):
    return (x + m - 1) // m * m


def _cdiv(a, b):
    return -(-a // b)


def _pick_batch_tile(batch):
    if batch <= 8:
        return 8                      # small-batch fallback
    # aim for >= 2 blocks along the 'parallel' batch axis (keeps both v7x TCs busy)
    bt = _round_up(_cdiv(batch, 2), 8)
    return min(bt, MAX_BATCH_TILE)


def _pick_frame_chunk(frames, bt, cpd, state_dim, window):
    # per-frame VMEM: x/state scratch (f32) + double-buffered ctrl (f32 block)
    # + double-buffered out (f32 block)
    per_frame = bt * (state_dim * 4 + 2 * cpd * 4 + 2 * window * 4)
    cap = max(8, min(MAX_FRAME_CHUNK, (VMEM_CHUNK_BUDGET // per_frame) // 8 * 8))
    n_chunks = _cdiv(frames, cap)
    # balanced chunks: don't run the serial recurrence over large tail padding
    return _round_up(_cdiv(frames, n_chunks), 8)


def ssm_kernel(ctrl_ref, wcomb_ref, whh_ref, wout_ref, out_ref,
               x_scratch, h_scratch):
    """One (batch-tile, frame-chunk) grid step, frame-major layout.

    ctrl_ref  : (FC, BT, C)  f32    control tile (frame-major)
    wcomb_ref : (C, S)       bf16   proj @ W_ih^T   (fused input weight)
    whh_ref   : (S, S)       bf16   W_hh^T
    wout_ref  : (S, W)       bf16   W_out^T
    out_ref   : (FC, BT, W)  f32    sin(out_proj(h))
    x_scratch : (FC*BT, S)   f32    per-frame input contribution, overwritten with states
    h_scratch : (BT, S)      f32    hidden state carried across frame chunks
    """
    fchunk, bt, c = ctrl_ref.shape
    w = wout_ref.shape[1]

    # NOTE: the h_scratch carry relies on the frame axis (grid axis 1, 'arbitrary')
    # iterating innermost and in order for each batch block; that holds for this
    # (batch, frame) grid.  Reset the state at the start of every sequence.
    @pl.when(pl.program_id(1) == 0)
    def _():
        h_scratch[...] = jnp.zeros_like(h_scratch)

    # ----- 1) fused input projection, hoisted off the serial chain -----
    #   (ctrl @ proj) @ W_ih^T == ctrl @ (proj @ W_ih^T): ONE big MXU matmul per chunk.
    #   Leading-dim collapse (FC, BT, C) -> (FC*BT, C) is layout-compatible (BT % 8 == 0).
    ctrl2d = ctrl_ref[...].reshape(fchunk * bt, c).astype(jnp.bfloat16)
    x_scratch[...] = jnp.dot(ctrl2d, wcomb_ref[...],
                             preferred_element_type=jnp.float32)

    # ----- 2) tanh-RNN recurrence: serial over frames, batched over BT rows -----
    whh = whh_ref[...]
    # TODO(synk): latch W_hh^T as the stationary MXU operand via pltpu.matmul_push_rhs /
    # matmul_acc_lhs / matmul_pop so the 128x128 weight is not re-streamed every frame.

    def body(t, h):
        row = pl.multiple_of(t * bt, bt)                 # sublane-aligned whole tiles
        x_t = x_scratch[pl.ds(row, bt), :]               # (BT, S) f32
        pre = x_t + jnp.dot(h.astype(jnp.bfloat16), whh,
                            preferred_element_type=jnp.float32)
        h_new = jnp.tanh(pre)                            # (BT, S) f32
        x_scratch[pl.ds(row, bt), :] = h_new             # x[t] is dead: reuse slot for state
        return h_new

    h_scratch[...] = lax.fori_loop(0, fchunk, body, h_scratch[...], unroll=8)

    # ----- 3) output projection + sin for the whole chunk (one big MXU matmul) -----
    states = x_scratch[...].astype(jnp.bfloat16)         # one-shot cast, off the chain
    y = jnp.dot(states, wout_ref[...], preferred_element_type=jnp.float32)
    out_ref[...] = jnp.sin(y).reshape(fchunk, bt, w).astype(out_ref.dtype)


@jax.jit
def ssm_forward(control, proj, w_ih, w_hh, w_out):
    """control: (batch, control_plane_dim, frames) -> (batch, 1, frames*window_size)."""
    batch, cpd, frames = control.shape
    assert cpd == CONTROL_PLANE_DIM
    state_dim = w_hh.shape[0]
    window = w_out.shape[0]

    # ---- fold proj @ W_ih^T into a single (C, S) input weight; bf16 weights for the MXU ----
    w_comb = (proj.astype(jnp.float32) @ w_ih.astype(jnp.float32).T).astype(jnp.bfloat16)
    whh_t = jnp.transpose(w_hh).astype(jnp.bfloat16)      # (S, S)
    wout_t = jnp.transpose(w_out).astype(jnp.bfloat16)    # (S, W)

    # ---- single transpose to the kernel's frame-major layout: (B, C, F) -> (F, B, C) ----
    ctrl = jnp.transpose(control, (2, 0, 1)).astype(jnp.float32)

    # ---- tiling: batch tile + balanced, VMEM-bounded frame chunks ----
    bt = _pick_batch_tile(batch)
    fchunk = _pick_frame_chunk(frames, bt, cpd, state_dim, window)
    b_pad = _round_up(batch, bt)
    f_pad = _round_up(frames, fchunk)
    ctrl = jnp.pad(ctrl, ((0, f_pad - frames), (0, b_pad - batch), (0, 0)))

    grid = (b_pad // bt, f_pad // fchunk)

    # ---- size the scoped VMEM limit to the real working set (with margin) ----
    scratch_bytes = fchunk * bt * state_dim * 4 + bt * state_dim * 4
    io_bytes = 2 * fchunk * bt * (cpd * 4 + window * 4)            # double-buffered blocks
    w_bytes = 2 * 2 * (cpd * state_dim + state_dim * state_dim + state_dim * window)
    vmem_limit = int(1.25 * (scratch_bytes + io_bytes + w_bytes)) + (4 << 20)
    vmem_limit = min(max(vmem_limit, 32 << 20), 56 << 20)

    out = pl.pallas_call(
        ssm_kernel,
        out_shape=jax.ShapeDtypeStruct((f_pad, b_pad, window), jnp.float32),
        grid_spec=pltpu.PrefetchScalarGridSpec(
            num_scalar_prefetch=0,
            grid=grid,
            in_specs=[
                pl.BlockSpec((fchunk, bt, cpd), lambda b, f: (f, b, 0)),
                pl.BlockSpec((cpd, state_dim), lambda b, f: (0, 0)),
                pl.BlockSpec((state_dim, state_dim), lambda b, f: (0, 0)),
                pl.BlockSpec((state_dim, window), lambda b, f: (0, 0)),
            ],
            out_specs=pl.BlockSpec((fchunk, bt, window), lambda b, f: (f, b, 0)),
            scratch_shapes=[
                pltpu.VMEM((fchunk * bt, state_dim), jnp.float32),  # x_pre -> states (reused)
                pltpu.VMEM((bt, state_dim), jnp.float32),           # carried hidden state
            ],
        ),
        compiler_params=pltpu.CompilerParams(
            dimension_semantics=("parallel", "arbitrary"),
            vmem_limit_bytes=vmem_limit),
    )(ctrl, w_comb, whh_t, wout_t)

    # glue: drop padding, back to batch-major, then PyTorch's .view(batch, 1, -1)
    out = out[:frames, :batch]                             # (F, B, W)
    out = jnp.transpose(out, (1, 0, 2))                    # (B, F, W)
    # TODO(synk): emit a bf16 output block on v5e if downstream tolerates it (halves the HBM stream).
    return out.reshape(batch, 1, frames * window)


def ssm_reference(control, proj, w_ih, w_hh, w_out):
    """Pure-JAX f32 reference of the PyTorch forward (for verification)."""
    batch, cpd, frames = control.shape
    x = jnp.einsum('bcf,cd->bfd', control, proj)              # (B, F, D)
    state_dim = w_hh.shape[0]

    def step(h, xt):
        h_new = jnp.tanh(xt @ w_ih.T + h @ w_hh.T)            # (B, S)
        return h_new, h_new

    h0 = jnp.zeros((batch, state_dim), jnp.float32)
    _, states = lax.scan(step, h0, jnp.transpose(x, (1, 0, 2)))
    states = jnp.transpose(states, (1, 0, 2))                 # (B, F, S)
    y = states @ w_out.T                                      # (B, F, W)
    return jnp.sin(y.reshape(batch, 1, -1))


if __name__ == "__main__":
    key = jax.random.PRNGKey(0)
    k_ctrl, k_proj, k_ih, k_hh, k_out = jax.random.split(key, 5)

    batch, frames = 2, 8
    control = jax.random.normal(k_ctrl, (batch, CONTROL_PLANE_DIM, frames),
                                dtype=jnp.float32)

    # deterministic parameter init (matches shapes from __init__; synthetic values)
    proj = jax.random.uniform(k_proj, (CONTROL_PLANE_DIM, INPUT_DIM),
                              minval=-0.01, maxval=0.01, dtype=jnp.float32)
    w_ih = jax.random.uniform(k_ih, (STATE_DIM, INPUT_DIM),
                              minval=-0.05, maxval=0.05, dtype=jnp.float32)
    w_hh = jax.random.uniform(k_hh, (STATE_DIM, STATE_DIM),
                              minval=-0.05, maxval=0.05, dtype=jnp.float32)
    w_out = jax.random.uniform(k_out, (WINDOW_SIZE, STATE_DIM),
                               minval=-0.05, maxval=0.05, dtype=jnp.float32)

    out = ssm_forward(control, proj, w_ih, w_hh, w_out)
    out = jax.block_until_ready(out)

    ref = ssm_reference(control, proj, w_ih, w_hh, w_out)
    assert out.shape == (batch, 1, frames * WINDOW_SIZE), out.shape
    # bf16 MXU inputs + folded (proj @ W_ih^T) introduce small numerical deltas vs the
    # f32 reference; tanh-bounded state keeps them tiny at this sequence length.
    assert jnp.allclose(out, ref, atol=2e-3, rtol=5e-2), "mismatch vs reference"

    print("KERNEL_OK")
</pallas_src>

<mosaic_0001>
module attributes {stable_mosaic.version = 11 : i64} {
  func.func @ssm_kernel(%arg0: i32, %arg1: i32, %arg2: memref<8x8x64xf32, #tpu.memory_space<vmem>>, %arg3: memref<64x128xbf16, #tpu.memory_space<vmem>>, %arg4: memref<128x128xbf16, #tpu.memory_space<vmem>>, %arg5: memref<128x128xbf16, #tpu.memory_space<vmem>>, %arg6: memref<8x8x128xf32, #tpu.memory_space<vmem>>, %arg7: memref<64x128xf32, #tpu.memory_space<vmem>>, %arg8: memref<8x128xf32, #tpu.memory_space<vmem>>) attributes {dimension_semantics = [#tpu.dimension_semantics<parallel>, #tpu.dimension_semantics<arbitrary>], iteration_bounds = array<i64: 1, 1>, scalar_prefetch = 0 : i64, scratch_operands = 2 : i64, tpu.core_type = #tpu.core_type<tc>, window_params = [{transform_indices = @transform_0, window_bounds = array<i64: 8, 8, 64>}, {pipeline_mode = #tpu.pipeline_mode<synchronous>, transform_indices = @transform_1, window_bounds = array<i64: 64, 128>}, {pipeline_mode = #tpu.pipeline_mode<synchronous>, transform_indices = @transform_2, window_bounds = array<i64: 128, 128>}, {pipeline_mode = #tpu.pipeline_mode<synchronous>, transform_indices = @transform_3, window_bounds = array<i64: 128, 128>}, {transform_indices = @transform_4, window_bounds = array<i64: 8, 8, 128>}]} {
    %c0_i32 = arith.constant 0 : i32
    %0 = arith.cmpi eq, %arg1, %c0_i32 : i32
    %1 = arith.extui %0 : i1 to i32
    %c0_i32_0 = arith.constant 0 : i32
    %2 = arith.cmpi ne, %1, %c0_i32_0 : i32
    scf.if %2 {
      %cst_54 = arith.constant 0.000000e+00 : f32
      %99 = vector.broadcast %cst_54 : f32 to vector<8x128xf32>
      %c0_55 = arith.constant 0 : index
      %c0_56 = arith.constant 0 : index
      %100 = vector.load %arg8[%c0_55, %c0_56] : memref<8x128xf32, #tpu.memory_space<vmem>>, vector<8x128xf32>
      tpu.vector_store %arg8[%c0_55, %c0_56], %99 {strides = array<i32>} : memref<8x128xf32, #tpu.memory_space<vmem>>, vector<8x128xf32>,
    } else {
    }
    %c0 = arith.constant 0 : index
    %c0_1 = arith.constant 0 : index
    %c0_2 = arith.constant 0 : index
    %3 = vector.load %arg2[%c0, %c0_1, %c0_2] : memref<8x8x64xf32, #tpu.memory_space<vmem>>, vector<8x8x64xf32>
    %4 = vector.shape_cast %3 : vector<8x8x64xf32> to vector<64x64xf32>
    %5 = arith.truncf %4 : vector<64x64xf32> to vector<64x64xbf16>
    %c0_3 = arith.constant 0 : index
    %c0_4 = arith.constant 0 : index
    %6 = vector.load %arg3[%c0_3, %c0_4] : memref<64x128xbf16, #tpu.memory_space<vmem>>, vector<64x128xbf16>
    %cst = arith.constant dense<0.000000e+00> : vector<64x128xf32>
    %7 = tpu.matmul %5, %6, %cst {dimension_numbers = #tpu.dot_dimension_numbers<[1], [0], [0], [1], [0, 0, 1, 1], [], []>} : vector<64x64xbf16>, vector<64x128xbf16>, vector<64x128xf32> -> vector<64x128xf32>
    %c0_5 = arith.constant 0 : index
    %c0_6 = arith.constant 0 : index
    %8 = vector.load %arg7[%c0_5, %c0_6] : memref<64x128xf32, #tpu.memory_space<vmem>>, vector<64x128xf32>
    tpu.vector_store %arg7[%c0_5, %c0_6], %7 {strides = array<i32>} : memref<64x128xf32, #tpu.memory_space<vmem>>, vector<64x128xf32>,
    %c0_7 = arith.constant 0 : index
    %c0_8 = arith.constant 0 : index
    %9 = vector.load %arg4[%c0_7, %c0_8] : memref<128x128xbf16, #tpu.memory_space<vmem>>, vector<128x128xbf16>
    %c0_9 = arith.constant 0 : index
    %c0_10 = arith.constant 0 : index
    %10 = vector.load %arg8[%c0_9, %c0_10] : memref<8x128xf32, #tpu.memory_space<vmem>>, vector<8x128xf32>
    %c0_i32_11 = arith.constant 0 : i32
    %c8_i32 = arith.constant 8 : i32
    %11 = arith.muli %c0_i32_11, %c8_i32 : i32
    %12 = tpu.assume_multiple %11, 8 : i32
    %13 = arith.index_cast %12 : i32 to index
    %c0_12 = arith.constant 0 : index
    %14 = vector.load %arg7[%13, %c0_12] : memref<64x128xf32, #tpu.memory_space<vmem>>, vector<8x128xf32>
    %15 = arith.truncf %10 : vector<8x128xf32> to vector<8x128xbf16>
    %cst_13 = arith.constant dense<0.000000e+00> : vector<8x128xf32>
    %16 = tpu.matmul %15, %9, %cst_13 {dimension_numbers = #tpu.dot_dimension_numbers<[1], [0], [0], [1], [0, 0, 1, 1], [], []>} : vector<8x128xbf16>, vector<128x128xbf16>, vector<8x128xf32> -> vector<8x128xf32>
    %17 = arith.addf %14, %16 : vector<8x128xf32>
    %18 = math.tanh %17 : vector<8x128xf32>
    %19 = arith.index_cast %12 : i32 to index
    %c0_14 = arith.constant 0 : index
    %20 = vector.load %arg7[%19, %c0_14] : memref<64x128xf32, #tpu.memory_space<vmem>>, vector<8x128xf32>
    tpu.vector_store %arg7[%19, %c0_14], %18 {strides = array<i32>} : memref<64x128xf32, #tpu.memory_space<vmem>>, vector<8x128xf32>,
    %c1_i32 = arith.constant 1 : i32
    %c8_i32_15 = arith.constant 8 : i32
    %21 = arith.muli %c1_i32, %c8_i32_15 : i32
    %22 = tpu.assume_multiple %21, 8 : i32
    %23 = arith.index_cast %22 : i32 to index
    %c0_16 = arith.constant 0 : index
    %24 = vector.load %arg7[%23, %c0_16] : memref<64x128xf32, #tpu.memory_space<vmem>>, vector<8x128xf32>
    %25 = arith.truncf %18 : vector<8x128xf32> to vector<8x128xbf16>
    %cst_17 = arith.constant dense<0.000000e+00> : vector<8x128xf32>
    %26 = tpu.matmul %25, %9, %cst_17 {dimension_numbers = #tpu.dot_dimension_numbers<[1], [0], [0], [1], [0, 0, 1, 1], [], []>} : vector<8x128xbf16>, vector<128x128xbf16>, vector<8x128xf32> -> vector<8x128xf32>
    %27 = arith.addf %24, %26 : vector<8x128xf32>
    %28 = math.tanh %27 : vector<8x128xf32>
    %29 = arith.index_cast %22 : i32 to index
    %c0_18 = arith.constant 0 : index
    %30 = vector.load %arg7[%29, %c0_18] : memref<64x128xf32, #tpu.memory_space<vmem>>, vector<8x128xf32>
    tpu.vector_store %arg7[%29, %c0_18], %28 {strides = array<i32>} : memref<64x128xf32, #tpu.memory_space<vmem>>, vector<8x128xf32>,
    %c2_i32 = arith.constant 2 : i32
    %c8_i32_19 = arith.constant 8 : i32
    %31 = arith.muli %c2_i32, %c8_i32_19 : i32
    %32 = tpu.assume_multiple %31, 8 : i32
    %33 = arith.index_cast %32 : i32 to index
    %c0_20 = arith.constant 0 : index
    %34 = vector.load %arg7[%33, %c0_20] : memref<64x128xf32, #tpu.memory_space<vmem>>, vector<8x128xf32>
    %35 = arith.truncf %28 : vector<8x128xf32> to vector<8x128xbf16>
    %cst_21 = arith.constant dense<0.000000e+00> : vector<8x128xf32>
    %36 = tpu.matmul %35, %9, %cst_21 {dimension_numbers = #tpu.dot_dimension_numbers<[1], [0], [0], [1], [0, 0, 1, 1], [], []>} : vector<8x128xbf16>, vector<128x128xbf16>, vector<8x128xf32> -> vector<8x128xf32>
    %37 = arith.addf %34, %36 : vector<8x128xf32>
    %38 = math.tanh %37 : vector<8x128xf32>
    %39 = arith.index_cast %32 : i32 to index
    %c0_22 = arith.constant 0 : index
    %40 = vector.load %arg7[%39, %c0_22] : memref<64x128xf32, #tpu.memory_space<vmem>>, vector<8x128xf32>
    tpu.vector_store %arg7[%39, %c0_22], %38 {strides = array<i32>} : memref<64x128xf32, #tpu.memory_space<vmem>>, vector<8x128xf32>,
    %c3_i32 = arith.constant 3 : i32
    %c8_i32_23 = arith.constant 8 : i32
    %41 = arith.muli %c3_i32, %c8_i32_23 : i32
    %42 = tpu.assume_multiple %41, 8 : i32
    %43 = arith.index_cast %42 : i32 to index
    %c0_24 = arith.constant 0 : index
    %44 = vector.load %arg7[%43, %c0_24] : memref<64x128xf32, #tpu.memory_space<vmem>>, vector<8x128xf32>
    %45 = arith.truncf %38 : vector<8x128xf32> to vector<8x128xbf16>
    %cst_25 = arith.constant dense<0.000000e+00> : vector<8x128xf32>
    %46 = tpu.matmul %45, %9, %cst_25 {dimension_numbers = #tpu.dot_dimension_numbers<[1], [0], [0], [1], [0, 0, 1, 1], [], []>} : vector<8x128xbf16>, vector<128x128xbf16>, vector<8x128xf32> -> vector<8x128xf32>
    %47 = arith.addf %44, %46 : vector<8x128xf32>
    %48 = math.tanh %47 : vector<8x128xf32>
    %49 = arith.index_cast %42 : i32 to index
    %c0_26 = arith.constant 0 : index
    %50 = vector.load %arg7[%49, %c0_26] : memref<64x128xf32, #tpu.memory_space<vmem>>, vector<8x128xf32>
    tpu.vector_store %arg7[%49, %c0_26], %48 {strides = array<i32>} : memref<64x128xf32, #tpu.memory_space<vmem>>, vector<8x128xf32>,
    %c4_i32 = arith.constant 4 : i32
    %c8_i32_27 = arith.constant 8 : i32
    %51 = arith.muli %c4_i32, %c8_i32_27 : i32
    %52 = tpu.assume_multiple %51, 8 : i32
    %53 = arith.index_cast %52 : i32 to index
    %c0_28 = arith.constant 0 : index
    %54 = vector.load %arg7[%53, %c0_28] : memref<64x128xf32, #tpu.memory_space<vmem>>, vector<8x128xf32>
    %55 = arith.truncf %48 : vector<8x128xf32> to vector<8x128xbf16>
    %cst_29 = arith.constant dense<0.000000e+00> : vector<8x128xf32>
    %56 = tpu.matmul %55, %9, %cst_29 {dimension_numbers = #tpu.dot_dimension_numbers<[1], [0], [0], [1], [0, 0, 1, 1], [], []>} : vector<8x128xbf16>, vector<128x128xbf16>, vector<8x128xf32> -> vector<8x128xf32>
    %57 = arith.addf %54, %56 : vector<8x128xf32>
    %58 = math.tanh %57 : vector<8x128xf32>
    %59 = arith.index_cast %52 : i32 to index
    %c0_30 = arith.constant 0 : index
    %60 = vector.load %arg7[%59, %c0_30] : memref<64x128xf32, #tpu.memory_space<vmem>>, vector<8x128xf32>
    tpu.vector_store %arg7[%59, %c0_30], %58 {strides = array<i32>} : memref<64x128xf32, #tpu.memory_space<vmem>>, vector<8x128xf32>,
    %c5_i32 = arith.constant 5 : i32
    %c8_i32_31 = arith.constant 8 : i32
    %61 = arith.muli %c5_i32, %c8_i32_31 : i32
    %62 = tpu.assume_multiple %61, 8 : i32
    %63 = arith.index_cast %62 : i32 to index
    %c0_32 = arith.constant 0 : index
    %64 = vector.load %arg7[%63, %c0_32] : memref<64x128xf32, #tpu.memory_space<vmem>>, vector<8x128xf32>
    %65 = arith.truncf %58 : vector<8x128xf32> to vector<8x128xbf16>
    %cst_33 = arith.constant dense<0.000000e+00> : vector<8x128xf32>
    %66 = tpu.matmul %65, %9, %cst_33 {dimension_numbers = #tpu.dot_dimension_numbers<[1], [0], [0], [1], [0, 0, 1, 1], [], []>} : vector<8x128xbf16>, vector<128x128xbf16>, vector<8x128xf32> -> vector<8x128xf32>
    %67 = arith.addf %64, %66 : vector<8x128xf32>
    %68 = math.tanh %67 : vector<8x128xf32>
    %69 = arith.index_cast %62 : i32 to index
    %c0_34 = arith.constant 0 : index
    %70 = vector.load %arg7[%69, %c0_34] : memref<64x128xf32, #tpu.memory_space<vmem>>, vector<8x128xf32>
    tpu.vector_store %arg7[%69, %c0_34], %68 {strides = array<i32>} : memref<64x128xf32, #tpu.memory_space<vmem>>, vector<8x128xf32>,
    %c6_i32 = arith.constant 6 : i32
    %c8_i32_35 = arith.constant 8 : i32
    %71 = arith.muli %c6_i32, %c8_i32_35 : i32
    %72 = tpu.assume_multiple %71, 8 : i32
    %73 = arith.index_cast %72 : i32 to index
    %c0_36 = arith.constant 0 : index
    %74 = vector.load %arg7[%73, %c0_36] : memref<64x128xf32, #tpu.memory_space<vmem>>, vector<8x128xf32>
    %75 = arith.truncf %68 : vector<8x128xf32> to vector<8x128xbf16>
    %cst_37 = arith.constant dense<0.000000e+00> : vector<8x128xf32>
    %76 = tpu.matmul %75, %9, %cst_37 {dimension_numbers = #tpu.dot_dimension_numbers<[1], [0], [0], [1], [0, 0, 1, 1], [], []>} : vector<8x128xbf16>, vector<128x128xbf16>, vector<8x128xf32> -> vector<8x128xf32>
    %77 = arith.addf %74, %76 : vector<8x128xf32>
    %78 = math.tanh %77 : vector<8x128xf32>
    %79 = arith.index_cast %72 : i32 to index
    %c0_38 = arith.constant 0 : index
    %80 = vector.load %arg7[%79, %c0_38] : memref<64x128xf32, #tpu.memory_space<vmem>>, vector<8x128xf32>
    tpu.vector_store %arg7[%79, %c0_38], %78 {strides = array<i32>} : memref<64x128xf32, #tpu.memory_space<vmem>>, vector<8x128xf32>,
    %c7_i32 = arith.constant 7 : i32
    %c8_i32_39 = arith.constant 8 : i32
    %81 = arith.muli %c7_i32, %c8_i32_39 : i32
    %82 = tpu.assume_multiple %81, 8 : i32
    %83 = arith.index_cast %82 : i32 to index
    %c0_40 = arith.constant 0 : index
    %84 = vector.load %arg7[%83, %c0_40] : memref<64x128xf32, #tpu.memory_space<vmem>>, vector<8x128xf32>
    %85 = arith.truncf %78 : vector<8x128xf32> to vector<8x128xbf16>
    %cst_41 = arith.constant dense<0.000000e+00> : vector<8x128xf32>
    %86 = tpu.matmul %85, %9, %cst_41 {dimension_numbers = #tpu.dot_dimension_numbers<[1], [0], [0], [1], [0, 0, 1, 1], [], []>} : vector<8x128xbf16>, vector<128x128xbf16>, vector<8x128xf32> -> vector<8x128xf32>
    %87 = arith.addf %84, %86 : vector<8x128xf32>
    %88 = math.tanh %87 : vector<8x128xf32>
    %89 = arith.index_cast %82 : i32 to index
    %c0_42 = arith.constant 0 : index
    %90 = vector.load %arg7[%89, %c0_42] : memref<64x128xf32, #tpu.memory_space<vmem>>, vector<8x128xf32>
    tpu.vector_store %arg7[%89, %c0_42], %88 {strides = array<i32>} : memref<64x128xf32, #tpu.memory_space<vmem>>, vector<8x128xf32>,
    %c8_i32_43 = arith.constant 8 : i32
    %c0_44 = arith.constant 0 : index
    %c0_45 = arith.constant 0 : index
    %91 = vector.load %arg8[%c0_44, %c0_45] : memref<8x128xf32, #tpu.memory_space<vmem>>, vector<8x128xf32>
    tpu.vector_store %arg8[%c0_44, %c0_45], %88 {strides = array<i32>} : memref<8x128xf32, #tpu.memory_space<vmem>>, vector<8x128xf32>,
    %c0_46 = arith.constant 0 : index
    %c0_47 = arith.constant 0 : index
    %92 = vector.load %arg7[%c0_46, %c0_47] : memref<64x128xf32, #tpu.memory_space<vmem>>, vector<64x128xf32>
    %93 = arith.truncf %92 : vector<64x128xf32> to vector<64x128xbf16>
    %c0_48 = arith.constant 0 : index
    %c0_49 = arith.constant 0 : index
    %94 = vector.load %arg5[%c0_48, %c0_49] : memref<128x128xbf16, #tpu.memory_space<vmem>>, vector<128x128xbf16>
    %cst_50 = arith.constant dense<0.000000e+00> : vector<64x128xf32>
    %95 = tpu.matmul %93, %94, %cst_50 {dimension_numbers = #tpu.dot_dimension_numbers<[1], [0], [0], [1], [0, 0, 1, 1], [], []>} : vector<64x128xbf16>, vector<128x128xbf16>, vector<64x128xf32> -> vector<64x128xf32>
    %96 = math.sin %95 : vector<64x128xf32>
    %97 = vector.shape_cast %96 : vector<64x128xf32> to vector<8x8x128xf32>
    %c0_51 = arith.constant 0 : index
    %c0_52 = arith.constant 0 : index
    %c0_53 = arith.constant 0 : index
    %98 = vector.load %arg6[%c0_51, %c0_52, %c0_53] : memref<8x8x128xf32, #tpu.memory_space<vmem>>, vector<8x8x128xf32>
    tpu.vector_store %arg6[%c0_51, %c0_52, %c0_53], %97 {strides = array<i32>} : memref<8x8x128xf32, #tpu.memory_space<vmem>>, vector<8x8x128xf32>,
    return
  }
  func.func @transform_0(%arg0: i32, %arg1: i32) -> (i32, i32, i32) {
    %c0_i32 = arith.constant 0 : i32
    %c0_i32_0 = arith.constant 0 : i32
    return %arg1, %arg0, %c0_i32 : i32, i32, i32
  }
  func.func @transform_1(%arg0: i32, %arg1: i32) -> (i32, i32) {
    %c0_i32 = arith.constant 0 : i32
    %c0_i32_0 = arith.constant 0 : i32
    %c0_i32_1 = arith.constant 0 : i32
    return %c0_i32, %c0_i32_0 : i32, i32
  }
  func.func @transform_2(%arg0: i32, %arg1: i32) -> (i32, i32) {
    %c0_i32 = arith.constant 0 : i32
    %c0_i32_0 = arith.constant 0 : i32
    %c0_i32_1 = arith.constant 0 : i32
    return %c0_i32, %c0_i32_0 : i32, i32
  }
  func.func @transform_3(%arg0: i32, %arg1: i32) -> (i32, i32) {
    %c0_i32 = arith.constant 0 : i32
    %c0_i32_0 = arith.constant 0 : i32
    %c0_i32_1 = arith.constant 0 : i32
    return %c0_i32, %c0_i32_0 : i32, i32
  }
  func.func @transform_4(%arg0: i32, %arg1: i32) -> (i32, i32, i32) {
    %c0_i32 = arith.constant 0 : i32
    %c0_i32_0 = arith.constant 0 : i32
    return %arg1, %arg0, %c0_i32 : i32, i32, i32
  }
}

</mosaic_0001>

<llo_original>
// kernel: ssm_forward.1
$region0: #{ssm_forward.1}
  #allocation0 [shape = 'u32[]', space=smem, size = 0x4, offset = 0x4, fixed_abs, tag = 'smem constant byte address 0x4 - core index']
  #allocation1 [shape = 'u32[144,128]{1,0:T(1,128)}', space=vmem, size = 0x12000, scoped, tag = 'internal scratch']
  #allocation2 [shape = 'f32[64,128]{1,0:T(8,128)}', space=vmem, size = 0x8000, scoped, tag = 'scratch operand']
  #allocation3 [shape = 'f32[8,128]{1,0:T(8,128)}', space=vmem, size = 0x1000, scoped, tag = 'scratch operand']
  %s0 = inlined_call_operand.vmem [shape: f32[8,8,64], index: 0, kind: input, shape index: {}]
  %s1 = inlined_call_operand.vmem [shape: bf16[64,128], index: 1, kind: input, shape index: {}]
  %s2 = inlined_call_operand.vmem [shape: bf16[128,128], index: 2, kind: input, shape index: {}]
  %s3 = inlined_call_operand.vmem [shape: bf16[128,128], index: 3, kind: input, shape index: {}]
  %s4 = inlined_call_operand.vmem [shape: f32[8,8,128], index: 4, kind: output, shape index: {}]
  %s5 = sld [smem:[#allocation0]]
  $region30: #{ssm_forward.1} parent=0
    _
  %s7 = ssub.s32 1, %s5
  %s8 = scalar_select 0, %s7, %s5
  // Predicated region
  $region2: #{ssm_forward.1} parent=0 // pred_check
    _
  $region3: #{ssm_forward.1} parent=0 // pred_check_branch
    %10 = sbr.rel (0) target = $region5
  $region4: #{ssm_forward.1} parent=0 // pred_region
    _
  $region5: #{ssm_forward.1} parent=0 // pred_fallthru
    _
  // Predicated region
  $region6: #{ssm_forward.1} parent=0 // pred_check
    _
  $region7: #{ssm_forward.1} parent=0 // pred_check_branch
    %12 = sbr.rel (0) target = $region9
  $region8: #{ssm_forward.1} parent=0 // pred_region
    _
  $region9: #{ssm_forward.1} parent=0 // pred_fallthru
    _
  // Predicated region
  $region10: #{ssm_forward.1} parent=0 // pred_check
    _
  $region11: #{ssm_forward.1} parent=0 // pred_check_branch
    %14 = sbr.rel (0) target = $region13
  $region12: #{ssm_forward.1} parent=0 // pred_region
    _
  $region13: #{ssm_forward.1} parent=0 // pred_fallthru
    _
  // Predicated region
  $region14: #{ssm_forward.1} parent=0 // pred_check
    _
  $region15: #{ssm_forward.1} parent=0 // pred_check_branch
    %16 = sbr.rel (0) target = $region17
  $region16: #{ssm_forward.1} parent=0 // pred_region
    _
  $region17: #{ssm_forward.1} parent=0 // pred_fallthru
    _
  %p18 = scmp.eq.s32.totalorder 0, 0
  // Predicated region
  $region18: #{ssm_forward.1} parent=0 // pred_check
    %p19 = pneg %p18
  $region19: #{ssm_forward.1} parent=0 // pred_check_branch
    %21 = sbr.rel (%p19) target = $region21
  $region20: #{ssm_forward.1} parent=0 // pred_region
    %22 = vst [vmem:[#allocation3] sm:$0xff] 0.0
  $region21: #{ssm_forward.1} parent=0 // pred_fallthru
    _
  %v23 = vld [vmem:[%s0] sm:$0xff]
  %v24 = vld [vmem:[%s0 + $0x8] sm:$0xff]
  %v25 = vld [vmem:[%s0 + $0x10] sm:$0xff]
  %v26 = vld [vmem:[%s0 + $0x18] sm:$0xff]
  %v27 = vld [vmem:[%s0 + $0x20] sm:$0xff]
  %v28 = vld [vmem:[%s0 + $0x28] sm:$0xff]
  %v29 = vld [vmem:[%s0 + $0x30] sm:$0xff]
  %v30 = vld [vmem:[%s0 + $0x38] sm:$0xff]
  %v31 = vpack.c.bf16 %v24, %v23
  %v32 = vpack.c.bf16 %v26, %v25
  %v33 = vpack.c.bf16 %v28, %v27
  %v34 = vpack.c.bf16 %v30, %v29
  %v35 = vld [vmem:[%s1] sm:$0xf]
  %v36 = vld [vmem:[%s1 + $0x4] sm:$0xf]
  %v37 = vld [vmem:[%s1 + $0x8] sm:$0xf]
  %v38 = vld [vmem:[%s1 + $0xc] sm:$0xf]
  %v39 = vld [vmem:[%s1 + $0x10] sm:$0xf]
  %v40 = vld [vmem:[%s1 + $0x14] sm:$0xf]
  %v41 = vld [vmem:[%s1 + $0x18] sm:$0xf]
  %v42 = vld [vmem:[%s1 + $0x1c] sm:$0xf]
  %v51 = vunpack.c.l.b16 %v35
  %v52 = vunpack.c.l.b16 %v36
  %v53 = vunpack.c.l.b16 %v37
  %v54 = vunpack.c.l.b16 %v38
  %v55 = vunpack.c.l.b16 %v39
  %v56 = vunpack.c.l.b16 %v40
  %v57 = vunpack.c.l.b16 %v41
  %v58 = vunpack.c.l.b16 %v42
  %v59 = vpack.c.b16 %v52, %v51
  %v60 = vpack.c.b16 %v54, %v53
  %v61 = vpack.c.b16 %v56, %v55
  %v62 = vpack.c.b16 %v58, %v57
  %vm67 = vcmask 523264
  %v69 = vsel %vm67, %v31, 0
  %v72 = vsel %vm67, %v32, 0
  %v75 = vsel %vm67, %v33, 0
  %v78 = vsel %vm67, %v34, 0
  %80 = vmatprep.subr.bf16.mxu0 0
  %81 = vmatpush1.bf16.msra.mxu0 %v59
  %82 = vmatprep.subr.bf16.mxu0 0
  %83 = vmatpush1.bf16.msra.mxu0 %v60
  %84 = vmatprep.subr.bf16.mxu0 0
  %85 = vmatpush1.bf16.msra.mxu0 %v61
  %86 = vmatprep.subr.bf16.mxu0 0
  %87 = vmatpush1.bf16.msra.mxu0 %v62
  %88 = vmatprep.subr.bf16.mxu0 0
  %89 = vmatpush1.bf16.msra.mxu0 0
  %90 = vmatprep.subr.bf16.mxu0 0
  %91 = vmatpush1.bf16.msra.mxu0 0
  %92 = vmatprep.subr.bf16.mxu0 0
  %93 = vmatpush1.bf16.msra.mxu0 0
  %94 = vmatprep.subr.bf16.mxu0 0
  %95 = vmatpush1.bf16.msra.mxu0 0
  %96 = vmatprep.subr.bf16.mxu0 0
  %97 = vmatpush1.bf16.msra.mxu0 0
  %98 = vmatprep.subr.bf16.mxu0 0
  %99 = vmatpush1.bf16.msra.mxu0 0
  %100 = vmatprep.subr.bf16.mxu0 0
  %101 = vmatpush1.bf16.msra.mxu0 0
  %102 = vmatprep.subr.bf16.mxu0 0
  %103 = vmatpush1.bf16.msra.mxu0 0
  %104 = vmatprep.subr.bf16.mxu0 0
  %105 = vmatpush1.bf16.msra.mxu0 0
  %106 = vmatprep.subr.bf16.mxu0 0
  %107 = vmatpush1.bf16.msra.mxu0 0
  %108 = vmatprep.subr.bf16.mxu0 0
  %109 = vmatpush1.bf16.msra.mxu0 0
  %110 = vmatprep.subr.bf16.mxu0 0
  %111 = vmatpush1.bf16.msra.mxu0 0
  %112 = vmatprep.mubr.bf16.mxu0 0
  %113 = vmatmul.mubr.bf16.gmra.mrb[0].mxu0 %v69
  %v114 = vpop.f32.mrb[0].mxu0
  %v115 = vadd.f32 0.0, %v114
  %v116 = vpop.f32.mrb[0].mxu0
  %v117 = vpop.f32.mrb[0].mxu0
  %v118 = vadd.f32 0.0, %v117
  %v119 = vpop.f32.mrb[0].mxu0
  %120 = vmatprep.mubr.bf16.mxu0 0
  %121 = vmatmul.mubr.bf16.gmra.mrb[0].mxu0 %v72
  %v122 = vpop.f32.mrb[0].mxu0
  %v123 = vadd.f32 0.0, %v122
  %v124 = vpop.f32.mrb[0].mxu0
  %v125 = vpop.f32.mrb[0].mxu0
  %v126 = vadd.f32 0.0, %v125
  %v127 = vpop.f32.mrb[0].mxu0
  %128 = vmatprep.mubr.bf16.mxu0 0
  %129 = vmatmul.mubr.bf16.gmra.mrb[0].mxu0 %v75
  %v130 = vpop.f32.mrb[0].mxu0
  %v131 = vadd.f32 0.0, %v130
  %v132 = vpop.f32.mrb[0].mxu0
  %v133 = vpop.f32.mrb[0].mxu0
  %v134 = vadd.f32 0.0, %v133
  %v135 = vpop.f32.mrb[0].mxu0
  %136 = vmatprep.mubr.bf16.mxu0 0
  %137 = vmatmul.mubr.bf16.gmra.mrb[0].mxu0 %v78
  %v138 = vpop.f32.mrb[0].mxu0
  %v139 = vadd.f32 0.0, %v138
  %v140 = vpop.f32.mrb[0].mxu0
  %v141 = vpop.f32.mrb[0].mxu0
  %v142 = vadd.f32 0.0, %v141
  %v143 = vpop.f32.mrb[0].mxu0
  %144 = vdwg.mxu0
  %145 = vst [vmem:[#allocation2] sm:$0xff] %v115
  %146 = vst [vmem:[#allocation2 + $0x8] sm:$0xff] %v118
  %147 = vst [vmem:[#allocation2 + $0x10] sm:$0xff] %v123
  %148 = vst [vmem:[#allocation2 + $0x18] sm:$0xff] %v126
  %149 = vst [vmem:[#allocation2 + $0x20] sm:$0xff] %v131
  %150 = vst [vmem:[#allocation2 + $0x28] sm:$0xff] %v134
  %151 = vst [vmem:[#allocation2 + $0x30] sm:$0xff] %v139
  %152 = vst [vmem:[#allocation2 + $0x38] sm:$0xff] %v142
  %v153 = vld [vmem:[%s2] sm:$0xf]
  %v154 = vld [vmem:[%s2 + $0x4] sm:$0xf]
  %v155 = vld [vmem:[%s2 + $0x8] sm:$0xf]
  %v156 = vld [vmem:[%s2 + $0xc] sm:$0xf]
  %v157 = vld [vmem:[%s2 + $0x10] sm:$0xf]
  %v158 = vld [vmem:[%s2 + $0x14] sm:$0xf]
  %v159 = vld [vmem:[%s2 + $0x18] sm:$0xf]
  %v160 = vld [vmem:[%s2 + $0x1c] sm:$0xf]
  %v161 = vld [vmem:[%s2 + $0x20] sm:$0xf]
  %v162 = vld [vmem:[%s2 + $0x24] sm:$0xf]
  %v163 = vld [vmem:[%s2 + $0x28] sm:$0xf]
  %v164 = vld [vmem:[%s2 + $0x2c] sm:$0xf]
  %v165 = vld [vmem:[%s2 + $0x30] sm:$0xf]
  %v166 = vld [vmem:[%s2 + $0x34] sm:$0xf]
  %v167 = vld [vmem:[%s2 + $0x38] sm:$0xf]
  %v168 = vld [vmem:[%s2 + $0x3c] sm:$0xf]
  %v169 = vld [vmem:[#allocation3] sm:$0xff]
  %v170 = vld [vmem:[#allocation2] sm:$0xff]
  %v171 = vpack.c.bf16 %v169, %v169
  %v188 = vunpack.c.l.b16 %v153
  %v189 = vunpack.c.l.b16 %v154
  %v190 = vunpack.c.l.b16 %v155
  %v191 = vunpack.c.l.b16 %v156
  %v192 = vunpack.c.l.b16 %v157
  %v193 = vunpack.c.l.b16 %v158
  %v194 = vunpack.c.l.b16 %v159
  %v195 = vunpack.c.l.b16 %v160
  %v196 = vunpack.c.l.b16 %v161
  %v197 = vunpack.c.l.b16 %v162
  %v198 = vunpack.c.l.b16 %v163
  %v199 = vunpack.c.l.b16 %v164
  %v200 = vunpack.c.l.b16 %v165
  %v201 = vunpack.c.l.b16 %v166
  %v202 = vunpack.c.l.b16 %v167
  %v203 = vunpack.c.l.b16 %v168
  %v204 = vpack.c.b16 %v189, %v188
  %v205 = vpack.c.b16 %v191, %v190
  %v206 = vpack.c.b16 %v193, %v192
  %v207 = vpack.c.b16 %v195, %v194
  %v208 = vpack.c.b16 %v197, %v196
  %v209 = vpack.c.b16 %v199, %v198
  %v210 = vpack.c.b16 %v201, %v200
  %v211 = vpack.c.b16 %v203, %v202
  %220 = vmatprep.subr.bf16.mxu0 0
  %221 = vmatpush1.bf16.msra.mxu0 %v204
  %222 = vmatprep.subr.bf16.mxu0 0
  %223 = vmatpush1.bf16.msra.mxu0 %v205
  %224 = vmatprep.subr.bf16.mxu0 0
  %225 = vmatpush1.bf16.msra.mxu0 %v206
  %226 = vmatprep.subr.bf16.mxu0 0
  %227 = vmatpush1.bf16.msra.mxu0 %v207
  %228 = vmatprep.subr.bf16.mxu0 0
  %229 = vmatpush1.bf16.msra.mxu0 %v208
  %230 = vmatprep.subr.bf16.mxu0 0
  %231 = vmatpush1.bf16.msra.mxu0 %v209
  %232 = vmatprep.subr.bf16.mxu0 0
  %233 = vmatpush1.bf16.msra.mxu0 %v210
  %234 = vmatprep.subr.bf16.mxu0 0
  %235 = vmatpush1.bf16.msra.mxu0 %v211
  %236 = vmatprep.subr.bf16.mxu0 0
  %237 = vmatpush1.bf16.msra.mxu0 0
  %238 = vmatprep.subr.bf16.mxu0 0
  %239 = vmatpush1.bf16.msra.mxu0 0
  %240 = vmatprep.subr.bf16.mxu0 0
  %241 = vmatpush1.bf16.msra.mxu0 0
  %242 = vmatprep.subr.bf16.mxu0 0
  %243 = vmatpush1.bf16.msra.mxu0 0
  %244 = vmatprep.subr.bf16.mxu0 0
  %245 = vmatpush1.bf16.msra.mxu0 0
  %246 = vmatprep.subr.bf16.mxu0 0
  %247 = vmatpush1.bf16.msra.mxu0 0
  %248 = vmatprep.subr.bf16.mxu0 0
  %249 = vmatpush1.bf16.msra.mxu0 0
  %250 = vmatprep.subr.bf16.mxu0 0
  %251 = vmatpush1.bf16.msra.mxu0 0
  %252 = vmatprep.mubr.bf16.mxu0 0
  %253 = vmatmul.mubr.bf16.gmra.mrb[0].mxu0 %v171
  %v254 = vpop.f32.mrb[0].mxu0
  %v255 = vadd.f32 0.0, %v254
  %v256 = vpop.f32.mrb[0].mxu0
  %v257 = vpop.f32.mrb[0].mxu0
  %v258 = vpop.f32.mrb[0].mxu0
  %259 = vdwg.mxu0
  %v260 = vadd.f32 %v170, %v255
  %v261 = vtanh.pop %v260
  %262 = vst [vmem:[#allocation2] sm:$0xff] %v261
  %s263 = scalar_lea.vmem [#allocation2], 8
  %v264 = vld [vmem:[%s263] sm:$0xff]
  %v265 = vpack.c.bf16 %v261, %v261
  %266 = vmatprep.subr.bf16.mxu0 0
  %267 = vmatpush1.bf16.msra.mxu0 %v204
  %268 = vmatprep.subr.bf16.mxu0 0
  %269 = vmatpush1.bf16.msra.mxu0 %v205
  %270 = vmatprep.subr.bf16.mxu0 0
  %271 = vmatpush1.bf16.msra.mxu0 %v206
  %272 = vmatprep.subr.bf16.mxu0 0
  %273 = vmatpush1.bf16.msra.mxu0 %v207
  %274 = vmatprep.subr.bf16.mxu0 0
  %275 = vmatpush1.bf16.msra.mxu0 %v208
  %276 = vmatprep.subr.bf16.mxu0 0
  %277 = vmatpush1.bf16.msra.mxu0 %v209
  %278 = vmatprep.subr.bf16.mxu0 0
  %279 = vmatpush1.bf16.msra.mxu0 %v210
  %280 = vmatprep.subr.bf16.mxu0 0
  %281 = vmatpush1.bf16.msra.mxu0 %v211
  %282 = vmatprep.subr.bf16.mxu0 0
  %283 = vmatpush1.bf16.msra.mxu0 0
  %284 = vmatprep.subr.bf16.mxu0 0
  %285 = vmatpush1.bf16.msra.mxu0 0
  %286 = vmatprep.subr.bf16.mxu0 0
  %287 = vmatpush1.bf16.msra.mxu0 0
  %288 = vmatprep.subr.bf16.mxu0 0
  %289 = vmatpush1.bf16.msra.mxu0 0
  %290 = vmatprep.subr.bf16.mxu0 0
  %291 = vmatpush1.bf16.msra.mxu0 0
  %292 = vmatprep.subr.bf16.mxu0 0
  %293 = vmatpush1.bf16.msra.mxu0 0
  %294 = vmatprep.subr.bf16.mxu0 0
  %295 = vmatpush1.bf16.msra.mxu0 0
  %296 = vmatprep.subr.bf16.mxu0 0
  %297 = vmatpush1.bf16.msra.mxu0 0
  %298 = vmatprep.mubr.bf16.mxu0 0
  %299 = vmatmul.mubr.bf16.gmra.mrb[0].mxu0 %v265
  %v300 = vpop.f32.mrb[0].mxu0
  %v301 = vadd.f32 0.0, %v300
  %v302 = vpop.f32.mrb[0].mxu0
  %v303 = vpop.f32.mrb[0].mxu0
  %v304 = vpop.f32.mrb[0].mxu0
  %305 = vdwg.mxu0
  %v306 = vadd.f32 %v264, %v301
  %v307 = vtanh.pop %v306
  %308 = vst [vmem:[%s263] sm:$0xff] %v307
  %s309 = scalar_lea.vmem [#allocation2], 16
  %v310 = vld [vmem:[%s309] sm:$0xff]
  %v311 = vpack.c.bf16 %v307, %v307
  %312 = vmatprep.subr.bf16.mxu0 0
  %313 = vmatpush1.bf16.msra.mxu0 %v204
  %314 = vmatprep.subr.bf16.mxu0 0
  %315 = vmatpush1.bf16.msra.mxu0 %v205
  %316 = vmatprep.subr.bf16.mxu0 0
  %317 = vmatpush1.bf16.msra.mxu0 %v206
  %318 = vmatprep.subr.bf16.mxu0 0
  %319 = vmatpush1.bf16.msra.mxu0 %v207
  %320 = vmatprep.subr.bf16.mxu0 0
  %321 = vmatpush1.bf16.msra.mxu0 %v208
  %322 = vmatprep.subr.bf16.mxu0 0
  %323 = vmatpush1.bf16.msra.mxu0 %v209
  %324 = vmatprep.subr.bf16.mxu0 0
  %325 = vmatpush1.bf16.msra.mxu0 %v210
  %326 = vmatprep.subr.bf16.mxu0 0
  %327 = vmatpush1.bf16.msra.mxu0 %v211
  %328 = vmatprep.subr.bf16.mxu0 0
  %329 = vmatpush1.bf16.msra.mxu0 0
  %330 = vmatprep.subr.bf16.mxu0 0
  %331 = vmatpush1.bf16.msra.mxu0 0
  %332 = vmatprep.subr.bf16.mxu0 0
  %333 = vmatpush1.bf16.msra.mxu0 0
  %334 = vmatprep.subr.bf16.mxu0 0
  %335 = vmatpush1.bf16.msra.mxu0 0
  %336 = vmatprep.subr.bf16.mxu0 0
  %337 = vmatpush1.bf16.msra.mxu0 0
  %338 = vmatprep.subr.bf16.mxu0 0
  %339 = vmatpush1.bf16.msra.mxu0 0
  %340 = vmatprep.subr.bf16.mxu0 0
  %341 = vmatpush1.bf16.msra.mxu0 0
  %342 = vmatprep.subr.bf16.mxu0 0
  %343 = vmatpush1.bf16.msra.mxu0 0
  %344 = vmatprep.mubr.bf16.mxu0 0
  %345 = vmatmul.mubr.bf16.gmra.mrb[0].mxu0 %v311
  %v346 = vpop.f32.mrb[0].mxu0
  %v347 = vadd.f32 0.0, %v346
  %v348 = vpop.f32.mrb[0].mxu0
  %v349 = vpop.f32.mrb[0].mxu0
  %v350 = vpop.f32.mrb[0].mxu0
  %351 = vdwg.mxu0
  %v352 = vadd.f32 %v310, %v347
  %v353 = vtanh.pop %v352
  %354 = vst [vmem:[%s309] sm:$0xff] %v353
  %s355 = scalar_lea.vmem [#allocation2], 24
  %v356 = vld [vmem:[%s355] sm:$0xff]
  %v357 = vpack.c.bf16 %v353, %v353
  %358 = vmatprep.subr.bf16.mxu0 0
  %359 = vmatpush1.bf16.msra.mxu0 %v204
  %360 = vmatprep.subr.bf16.mxu0 0
  %361 = vmatpush1.bf16.msra.mxu0 %v205
  %362 = vmatprep.subr.bf16.mxu0 0
  %363 = vmatpush1.bf16.msra.mxu0 %v206
  %364 = vmatprep.subr.bf16.mxu0 0
  %365 = vmatpush1.bf16.msra.mxu0 %v207
  %366 = vmatprep.subr.bf16.mxu0 0
  %367 = vmatpush1.bf16.msra.mxu0 %v208
  %368 = vmatprep.subr.bf16.mxu0 0
  %369 = vmatpush1.bf16.msra.mxu0 %v209
  %370 = vmatprep.subr.bf16.mxu0 0
  %371 = vmatpush1.bf16.msra.mxu0 %v210
  %372 = vmatprep.subr.bf16.mxu0 0
  %373 = vmatpush1.bf16.msra.mxu0 %v211
  %374 = vmatprep.subr.bf16.mxu0 0
  %375 = vmatpush1.bf16.msra.mxu0 0
  %376 = vmatprep.subr.bf16.mxu0 0
  %377 = vmatpush1.bf16.msra.mxu0 0
  %378 = vmatprep.subr.bf16.mxu0 0
  %379 = vmatpush1.bf16.msra.mxu0 0
  %380 = vmatprep.subr.bf16.mxu0 0
  %381 = vmatpush1.bf16.msra.mxu0 0
  %382 = vmatprep.subr.bf16.mxu0 0
  %383 = vmatpush1.bf16.msra.mxu0 0
  %384 = vmatprep.subr.bf16.mxu0 0
  %385 = vmatpush1.bf16.msra.mxu0 0
  %386 = vmatprep.subr.bf16.mxu0 0
  %387 = vmatpush1.bf16.msra.mxu0 0
  %388 = vmatprep.subr.bf16.mxu0 0
  %389 = vmatpush1.bf16.msra.mxu0 0
  %390 = vmatprep.mubr.bf16.mxu0 0
  %391 = vmatmul.mubr.bf16.gmra.mrb[0].mxu0 %v357
  %v392 = vpop.f32.mrb[0].mxu0
  %v393 = vadd.f32 0.0, %v392
  %v394 = vpop.f32.mrb[0].mxu0
  %v395 = vpop.f32.mrb[0].mxu0
  %v396 = vpop.f32.mrb[0].mxu0
  %397 = vdwg.mxu0
  %v398 = vadd.f32 %v356, %v393
  %v399 = vtanh.pop %v398
  %400 = vst [vmem:[%s355] sm:$0xff] %v399
  %s401 = scalar_lea.vmem [#allocation2], 32
  %v402 = vld [vmem:[%s401] sm:$0xff]
  %v403 = vpack.c.bf16 %v399, %v399
  %404 = vmatprep.subr.bf16.mxu0 0
  %405 = vmatpush1.bf16.msra.mxu0 %v204
  %406 = vmatprep.subr.bf16.mxu0 0
  %407 = vmatpush1.bf16.msra.mxu0 %v205
  %408 = vmatprep.subr.bf16.mxu0 0
  %409 = vmatpush1.bf16.msra.mxu0 %v206
  %410 = vmatprep.subr.bf16.mxu0 0
  %411 = vmatpush1.bf16.msra.mxu0 %v207
  %412 = vmatprep.subr.bf16.mxu0 0
  %413 = vmatpush1.bf16.msra.mxu0 %v208
  %414 = vmatprep.subr.bf16.mxu0 0
  %415 = vmatpush1.bf16.msra.mxu0 %v209
  %416 = vmatprep.subr.bf16.mxu0 0
  %417 = vmatpush1.bf16.msra.mxu0 %v210
  %418 = vmatprep.subr.bf16.mxu0 0
  %419 = vmatpush1.bf16.msra.mxu0 %v211
  %420 = vmatprep.subr.bf16.mxu0 0
  %421 = vmatpush1.bf16.msra.mxu0 0
  %422 = vmatprep.subr.bf16.mxu0 0
  %423 = vmatpush1.bf16.msra.mxu0 0
  %424 = vmatprep.subr.bf16.mxu0 0
  %425 = vmatpush1.bf16.msra.mxu0 0
  %426 = vmatprep.subr.bf16.mxu0 0
  %427 = vmatpush1.bf16.msra.mxu0 0
  %428 = vmatprep.subr.bf16.mxu0 0
  %429 = vmatpush1.bf16.msra.mxu0 0
  %430 = vmatprep.subr.bf16.mxu0 0
  %431 = vmatpush1.bf16.msra.mxu0 0
  %432 = vmatprep.subr.bf16.mxu0 0
  %433 = vmatpush1.bf16.msra.mxu0 0
  %434 = vmatprep.subr.bf16.mxu0 0
  %435 = vmatpush1.bf16.msra.mxu0 0
  %436 = vmatprep.mubr.bf16.mxu0 0
  %437 = vmatmul.mubr.bf16.gmra.mrb[0].mxu0 %v403
  %v438 = vpop.f32.mrb[0].mxu0
  %v439 = vadd.f32 0.0, %v438
  %v440 = vpop.f32.mrb[0].mxu0
  %v441 = vpop.f32.mrb[0].mxu0
  %v442 = vpop.f32.mrb[0].mxu0
  %443 = vdwg.mxu0
  %v444 = vadd.f32 %v402, %v439
  %v445 = vtanh.pop %v444
  %446 = vst [vmem:[%s401] sm:$0xff] %v445
  %s447 = scalar_lea.vmem [#allocation2], 40
  %v448 = vld [vmem:[%s447] sm:$0xff]
  %v449 = vpack.c.bf16 %v445, %v445
  %450 = vmatprep.subr.bf16.mxu0 0
  %451 = vmatpush1.bf16.msra.mxu0 %v204
  %452 = vmatprep.subr.bf16.mxu0 0
  %453 = vmatpush1.bf16.msra.mxu0 %v205
  %454 = vmatprep.subr.bf16.mxu0 0
  %455 = vmatpush1.bf16.msra.mxu0 %v206
  %456 = vmatprep.subr.bf16.mxu0 0
  %457 = vmatpush1.bf16.msra.mxu0 %v207
  %458 = vmatprep.subr.bf16.mxu0 0
  %459 = vmatpush1.bf16.msra.mxu0 %v208
  %460 = vmatprep.subr.bf16.mxu0 0
  %461 = vmatpush1.bf16.msra.mxu0 %v209
  %462 = vmatprep.subr.bf16.mxu0 0
  %463 = vmatpush1.bf16.msra.mxu0 %v210
  %464 = vmatprep.subr.bf16.mxu0 0
  %465 = vmatpush1.bf16.msra.mxu0 %v211
  %466 = vmatprep.subr.bf16.mxu0 0
  %467 = vmatpush1.bf16.msra.mxu0 0
  %468 = vmatprep.subr.bf16.mxu0 0
  %469 = vmatpush1.bf16.msra.mxu0 0
  %470 = vmatprep.subr.bf16.mxu0 0
  %471 = vmatpush1.bf16.msra.mxu0 0
  %472 = vmatprep.subr.bf16.mxu0 0
  %473 = vmatpush1.bf16.msra.mxu0 0
  %474 = vmatprep.subr.bf16.mxu0 0
  %475 = vmatpush1.bf16.msra.mxu0 0
  %476 = vmatprep.subr.bf16.mxu0 0
  %477 = vmatpush1.bf16.msra.mxu0 0
  %478 = vmatprep.subr.bf16.mxu0 0
  %479 = vmatpush1.bf16.msra.mxu0 0
  %480 = vmatprep.subr.bf16.mxu0 0
  %481 = vmatpush1.bf16.msra.mxu0 0
  %482 = vmatprep.mubr.bf16.mxu0 0
  %483 = vmatmul.mubr.bf16.gmra.mrb[0].mxu0 %v449
  %v484 = vpop.f32.mrb[0].mxu0
  %v485 = vadd.f32 0.0, %v484
  %v486 = vpop.f32.mrb[0].mxu0
  %v487 = vpop.f32.mrb[0].mxu0
  %v488 = vpop.f32.mrb[0].mxu0
  %489 = vdwg.mxu0
  %v490 = vadd.f32 %v448, %v485
  %v491 = vtanh.pop %v490
  %492 = vst [vmem:[%s447] sm:$0xff] %v491
  %s493 = scalar_lea.vmem [#allocation2], 48
  %v494 = vld [vmem:[%s493] sm:$0xff]
  %v495 = vpack.c.bf16 %v491, %v491
  %496 = vmatprep.subr.bf16.mxu0 0
  %497 = vmatpush1.bf16.msra.mxu0 %v204
  %498 = vmatprep.subr.bf16.mxu0 0
  %499 = vmatpush1.bf16.msra.mxu0 %v205
  %500 = vmatprep.subr.bf16.mxu0 0
  %501 = vmatpush1.bf16.msra.mxu0 %v206
  %502 = vmatprep.subr.bf16.mxu0 0
  %503 = vmatpush1.bf16.msra.mxu0 %v207
  %504 = vmatprep.subr.bf16.mxu0 0
  %505 = vmatpush1.bf16.msra.mxu0 %v208
  %506 = vmatprep.subr.bf16.mxu0 0
  %507 = vmatpush1.bf16.msra.mxu0 %v209
  %508 = vmatprep.subr.bf16.mxu0 0
  %509 = vmatpush1.bf16.msra.mxu0 %v210
  %510 = vmatprep.subr.bf16.mxu0 0
  %511 = vmatpush1.bf16.msra.mxu0 %v211
  %512 = vmatprep.subr.bf16.mxu0 0
  %513 = vmatpush1.bf16.msra.mxu0 0
  %514 = vmatprep.subr.bf16.mxu0 0
  %515 = vmatpush1.bf16.msra.mxu0 0
  %516 = vmatprep.subr.bf16.mxu0 0
  %517 = vmatpush1.bf16.msra.mxu0 0
  %518 = vmatprep.subr.bf16.mxu0 0
  %519 = vmatpush1.bf16.msra.mxu0 0
  %520 = vmatprep.subr.bf16.mxu0 0
  %521 = vmatpush1.bf16.msra.mxu0 0
  %522 = vmatprep.subr.bf16.mxu0 0
  %523 = vmatpush1.bf16.msra.mxu0 0
  %524 = vmatprep.subr.bf16.mxu0 0
  %525 = vmatpush1.bf16.msra.mxu0 0
  %526 = vmatprep.subr.bf16.mxu0 0
  %527 = vmatpush1.bf16.msra.mxu0 0
  %528 = vmatprep.mubr.bf16.mxu0 0
  %529 = vmatmul.mubr.bf16.gmra.mrb[0].mxu0 %v495
  %v530 = vpop.f32.mrb[0].mxu0
  %v531 = vadd.f32 0.0, %v530
  %v532 = vpop.f32.mrb[0].mxu0
  %v533 = vpop.f32.mrb[0].mxu0
  %v534 = vpop.f32.mrb[0].mxu0
  %535 = vdwg.mxu0
  %v536 = vadd.f32 %v494, %v531
  %v537 = vtanh.pop %v536
  %538 = vst [vmem:[%s493] sm:$0xff] %v537
  %s539 = scalar_lea.vmem [#allocation2], 56
  %v540 = vld [vmem:[%s539] sm:$0xff]
  %v541 = vpack.c.bf16 %v537, %v537
  %542 = vmatprep.subr.bf16.mxu0 0
  %543 = vmatpush1.bf16.msra.mxu0 %v204
  %544 = vmatprep.subr.bf16.mxu0 0
  %545 = vmatpush1.bf16.msra.mxu0 %v205
  %546 = vmatprep.subr.bf16.mxu0 0
  %547 = vmatpush1.bf16.msra.mxu0 %v206
  %548 = vmatprep.subr.bf16.mxu0 0
  %549 = vmatpush1.bf16.msra.mxu0 %v207
  %550 = vmatprep.subr.bf16.mxu0 0
  %551 = vmatpush1.bf16.msra.mxu0 %v208
  %552 = vmatprep.subr.bf16.mxu0 0
  %553 = vmatpush1.bf16.msra.mxu0 %v209
  %554 = vmatprep.subr.bf16.mxu0 0
  %555 = vmatpush1.bf16.msra.mxu0 %v210
  %556 = vmatprep.subr.bf16.mxu0 0
  %557 = vmatpush1.bf16.msra.mxu0 %v211
  %558 = vmatprep.subr.bf16.mxu0 0
  %559 = vmatpush1.bf16.msra.mxu0 0
  %560 = vmatprep.subr.bf16.mxu0 0
  %561 = vmatpush1.bf16.msra.mxu0 0
  %562 = vmatprep.subr.bf16.mxu0 0
  %563 = vmatpush1.bf16.msra.mxu0 0
  %564 = vmatprep.subr.bf16.mxu0 0
  %565 = vmatpush1.bf16.msra.mxu0 0
  %566 = vmatprep.subr.bf16.mxu0 0
  %567 = vmatpush1.bf16.msra.mxu0 0
  %568 = vmatprep.subr.bf16.mxu0 0
  %569 = vmatpush1.bf16.msra.mxu0 0
  %570 = vmatprep.subr.bf16.mxu0 0
  %571 = vmatpush1.bf16.msra.mxu0 0
  %572 = vmatprep.subr.bf16.mxu0 0
  %573 = vmatpush1.bf16.msra.mxu0 0
  %574 = vmatprep.mubr.bf16.mxu0 0
  %575 = vmatmul.mubr.bf16.gmra.mrb[0].mxu0 %v541
  %v576 = vpop.f32.mrb[0].mxu0
  %v577 = vadd.f32 0.0, %v576
  %v578 = vpop.f32.mrb[0].mxu0
  %v579 = vpop.f32.mrb[0].mxu0
  %v580 = vpop.f32.mrb[0].mxu0
  %581 = vdwg.mxu0
  %v582 = vadd.f32 %v540, %v577
  %v583 = vtanh.pop %v582
  %584 = vst [vmem:[%s539] sm:$0xff] %v583
  %585 = vst [vmem:[#allocation3] sm:$0xff] %v583
  %v586 = vld [vmem:[#allocation2] sm:$0xff]
  %v587 = vld [vmem:[#allocation2 + $0x8] sm:$0xff]
  %v588 = vld [vmem:[#allocation2 + $0x10] sm:$0xff]
  %v589 = vld [vmem:[#allocation2 + $0x18] sm:$0xff]
  %v590 = vld [vmem:[#allocation2 + $0x20] sm:$0xff]
  %v591 = vld [vmem:[#allocation2 + $0x28] sm:$0xff]
  %v592 = vld [vmem:[#allocation2 + $0x30] sm:$0xff]
  %v593 = vld [vmem:[#allocation2 + $0x38] sm:$0xff]
  %v594 = vpack.c.bf16 %v587, %v586
  %v595 = vpack.c.bf16 %v589, %v588
  %v596 = vpack.c.bf16 %v591, %v590
  %v597 = vpack.c.bf16 %v593, %v592
  %v598 = vld [vmem:[%s3] sm:$0xf]
  %v599 = vld [vmem:[%s3 + $0x4] sm:$0xf]
  %v600 = vld [vmem:[%s3 + $0x8] sm:$0xf]
  %v601 = vld [vmem:[%s3 + $0xc] sm:$0xf]
  %v602 = vld [vmem:[%s3 + $0x10] sm:$0xf]
  %v603 = vld [vmem:[%s3 + $0x14] sm:$0xf]
  %v604 = vld [vmem:[%s3 + $0x18] sm:$0xf]
  %v605 = vld [vmem:[%s3 + $0x1c] sm:$0xf]
  %v606 = vld [vmem:[%s3 + $0x20] sm:$0xf]
  %v607 = vld [vmem:[%s3 + $0x24] sm:$0xf]
  %v608 = vld [vmem:[%s3 + $0x28] sm:$0xf]
  %v609 = vld [vmem:[%s3 + $0x2c] sm:$0xf]
  %v610 = vld [vmem:[%s3 + $0x30] sm:$0xf]
  %v611 = vld [vmem:[%s3 + $0x34] sm:$0xf]
  %v612 = vld [vmem:[%s3 + $0x38] sm:$0xf]
  %v613 = vld [vmem:[%s3 + $0x3c] sm:$0xf]
  %v630 = vunpack.c.l.b16 %v598
  %v631 = vunpack.c.l.b16 %v599
  %v632 = vunpack.c.l.b16 %v600
  %v633 = vunpack.c.l.b16 %v601
  %v634 = vunpack.c.l.b16 %v602
  %v635 = vunpack.c.l.b16 %v603
  %v636 = vunpack.c.l.b16 %v604
  %v637 = vunpack.c.l.b16 %v605
  %v638 = vunpack.c.l.b16 %v606
  %v639 = vunpack.c.l.b16 %v607
  %v640 = vunpack.c.l.b16 %v608
  %v641 = vunpack.c.l.b16 %v609
  %v642 = vunpack.c.l.b16 %v610
  %v643 = vunpack.c.l.b16 %v611
  %v644 = vunpack.c.l.b16 %v612
  %v645 = vunpack.c.l.b16 %v613
  %v646 = vpack.c.b16 %v631, %v630
  %v647 = vpack.c.b16 %v633, %v632
  %v648 = vpack.c.b16 %v635, %v634
  %v649 = vpack.c.b16 %v637, %v636
  %v650 = vpack.c.b16 %v639, %v638
  %v651 = vpack.c.b16 %v641, %v640
  %v652 = vpack.c.b16 %v643, %v642
  %v653 = vpack.c.b16 %v645, %v644
  %662 = vmatprep.subr.bf16.mxu0 0
  %663 = vmatpush1.bf16.msra.mxu0 %v646
  %664 = vmatprep.subr.bf16.mxu0 0
  %665 = vmatpush1.bf16.msra.mxu0 %v647
  %666 = vmatprep.subr.bf16.mxu0 0
  %667 = vmatpush1.bf16.msra.mxu0 %v648
  %668 = vmatprep.subr.bf16.mxu0 0
  %669 = vmatpush1.bf16.msra.mxu0 %v649
  %670 = vmatprep.subr.bf16.mxu0 0
  %671 = vmatpush1.bf16.msra.mxu0 %v650
  %672 = vmatprep.subr.bf16.mxu0 0
  %673 = vmatpush1.bf16.msra.mxu0 %v651
  %674 = vmatprep.subr.bf16.mxu0 0
  %675 = vmatpush1.bf16.msra.mxu0 %v652
  %676 = vmatprep.subr.bf16.mxu0 0
  %677 = vmatpush1.bf16.msra.mxu0 %v653
  %678 = vmatprep.subr.bf16.mxu0 0
  %679 = vmatpush1.bf16.msra.mxu0 0
  %680 = vmatprep.subr.bf16.mxu0 0
  %681 = vmatpush1.bf16.msra.mxu0 0
  %682 = vmatprep.subr.bf16.mxu0 0
  %683 = vmatpush1.bf16.msra.mxu0 0
  %684 = vmatprep.subr.bf16.mxu0 0
  %685 = vmatpush1.bf16.msra.mxu0 0
  %686 = vmatprep.subr.bf16.mxu0 0
  %687 = vmatpush1.bf16.msra.mxu0 0
  %688 = vmatprep.subr.bf16.mxu0 0
  %689 = vmatpush1.bf16.msra.mxu0 0
  %690 = vmatprep.subr.bf16.mxu0 0
  %691 = vmatpush1.bf16.msra.mxu0 0
  %692 = vmatprep.subr.bf16.mxu0 0
  %693 = vmatpush1.bf16.msra.mxu0 0
  %694 = vmatprep.mubr.bf16.mxu0 0
  %695 = vmatmul.mubr.bf16.gmra.mrb[0].mxu0 %v594
  %v696 = vpop.f32.mrb[0].mxu0
  %v697 = vadd.f32 0.0, %v696
  %v698 = vpop.f32.mrb[0].mxu0
  %v699 = vpop.f32.mrb[0].mxu0
  %v700 = vadd.f32 0.0, %v699
  %v701 = vpop.f32.mrb[0].mxu0
  %702 = vmatprep.mubr.bf16.mxu0 0
  %703 = vmatmul.mubr.bf16.gmra.mrb[0].mxu0 %v595
  %v704 = vpop.f32.mrb[0].mxu0
  %v705 = vadd.f32 0.0, %v704
  %v706 = vpop.f32.mrb[0].mxu0
  %v707 = vpop.f32.mrb[0].mxu0
  %v708 = vadd.f32 0.0, %v707
  %v709 = vpop.f32.mrb[0].mxu0
  %710 = vmatprep.mubr.bf16.mxu0 0
  %711 = vmatmul.mubr.bf16.gmra.mrb[0].mxu0 %v596
  %v712 = vpop.f32.mrb[0].mxu0
  %v713 = vadd.f32 0.0, %v712
  %v714 = vpop.f32.mrb[0].mxu0
  %v715 = vpop.f32.mrb[0].mxu0
  %v716 = vadd.f32 0.0, %v715
  %v717 = vpop.f32.mrb[0].mxu0
  %718 = vmatprep.mubr.bf16.mxu0 0
  %719 = vmatmul.mubr.bf16.gmra.mrb[0].mxu0 %v597
  %v720 = vpop.f32.mrb[0].mxu0
  %v721 = vadd.f32 0.0, %v720
  %v722 = vpop.f32.mrb[0].mxu0
  %v723 = vpop.f32.mrb[0].mxu0
  %v724 = vadd.f32 0.0, %v723
  %v725 = vpop.f32.mrb[0].mxu0
  %726 = vdwg.mxu0
  %v727 = vand.u32 2147483647, %v697
  %vm728 = vcmp.le.f32.partialorder %v727, 0.7853982
  %vm729 = vcmp.lt.s32.totalorder %v697, 0
  %v730 = vand.u32 %v697, 2139095040
  %v731 = vshrl.u32 %v730, 23
  %v732 = vsub.s32 %v731, 127
  %v733 = vand.u32 2147483647, %v697
  %v734 = vand.u32 %v733, 8388607
  %v735 = vor.u32 %v734, 8388608
  %v736 = vsub.s32 0, %v735
  %v737 = vadd.s32 %v732, 1
  %vm738 = vcmp.gt.s32.totalorder %v737, 0
  %v739 = vsel %vm738, %v737, 0
  %v740 = vshrl.u32 %v739, 5
  %v741 = vand.u32 %v739, 31
  %v742 = vsub.s32 32, %v741
  %v743 = vshrl.u32 683565275, %v742
  %v744 = vshll.u32 683565275, %v741
  %v745 = vshrl.u32 2475754826, %v742
  %v746 = vor.u32 %v744, %v745
  %v747 = vshll.u32 2475754826, %v741
  %v748 = vshrl.u32 2131351028, %v742
  %v749 = vor.u32 %v747, %v748
  %v750 = vshll.u32 2131351028, %v741
  %v751 = vshrl.u32 2102212464, %v742
  %v752 = vor.u32 %v750, %v751
  %v753 = vshll.u32 2102212464, %v741
  %v754 = vshrl.u32 920167782, %v742
  %v755 = vor.u32 %v753, %v754
  %v756 = vshll.u32 920167782, %v741
  %v757 = vshrl.u32 1326507024, %v742
  %v758 = vor.u32 %v756, %v757
  %vm759 = vcmp.lt.s32.totalorder %v740, 1
  %vm760 = vcmp.lt.s32.totalorder %v740, 2
  %vm761 = vcmp.lt.s32.totalorder %v740, 3
  %vm762 = vcmp.lt.s32.totalorder %v740, 4
  %v763 = vsel %vm759, %v743, %v746
  %v764 = vsel %vm762, %v752, 2102212464
  %v765 = vsel %vm761, %v749, %v764
  %v766 = vsel %vm760, %v763, %v765
  %v767 = vsel %vm759, %v746, %v749
  %v768 = vsel %vm762, %v755, 920167782
  %v769 = vsel %vm761, %v752, %v768
  %v770 = vsel %vm760, %v767, %v769
  %v771 = vsel %vm759, %v749, %v752
  %v772 = vsel %vm762, %v758, 1326507024
  %v773 = vsel %vm761, %v755, %v772
  %v774 = vsel %vm760, %v771, %v773
  %v775 = vshll.u32 %v735, 8
  %v776 = vmul.u32.u64.compose %v775, %v774
  %v777 = vextract.low.u32 %v776
  %v778 = vextract.high.u32 %v776
  %v779 = vmul.u32.u64.compose %v775, %v770
  %v780 = vextract.low.u32 %v779
  %v781 = vextract.high.u32 %v779
  %v782 = vmul.u32 %v775, %v766
  %v783 = vadd.s32 %v778, %v780
  %vm784 = vc.u32 %v778, %v780
  %v785 = vadd.s32 %v781, 1
  %v786 = vsel %vm784, %v785, %v781
  %v787 = vadd.s32 %v782, %v786
  %v788 = vadd.s32 %v787, 536870912
  %v789 = vshrl.u32 %v788, 30
  %v790 = vshll.u32 %v789, 30
  %v791 = vsub.s32 %v787, %v790
  %vm792 = vcmp.lt.s32.totalorder %v791, 0
  %v793 = vsub.s32 0, %v791
  %v794 = vsel %vm792, %v793, %v791
  %v795 = vclz %v794
  %v796 = vsub.s32 %v795, 2
  %vm797 = vcmp.gt.s32.totalorder 0, %v796
  %v798 = vsel %vm797, 0, %v796
  %v799 = vsub.s32 32, %v798
  %v800 = vshll.u32 %v791, %v798
  %v801 = vshrl.u32 %v783, %v799
  %v802 = vor.u32 %v800, %v801
  %v803 = vsub.s32 4294967266, %v798
  %v804 = vadd.s32 %v803, 127
  %v805 = vshll.u32 %v804, 23
  %v806 = vor.u32 4788187, %v805
  %v807 = vand.u32 2147483647, %v806
  %v809 = vcvt.s32.f32 %v802
  %v810 = vmul.f32 %v809, %v807
  %v811 = vxor.u32 %v810, 2147483648
  %v812 = vsel %vm729, %v811, %v810
  %v813 = vsub.s32 4, %v789
  %v814 = vsel %vm729, %v813, %v789
  %v815 = vsel %vm728, %v697, %v812
  %v816 = vsel %vm728, 0, %v814
  %v817 = vcosq.f32.pop %v815
  %v818 = vsinq.f32.pop %v815
  %vm819 = vweird.f32 %v697
  %v820 = vadd.s32 %v816, 3
  %v821 = vand.u32 %v820, 3
  %vm822 = vcmp.lt.s32.totalorder %v821, 2
  %vm823 = vcmp.eq.s32.totalorder %v821, 0
  %v824 = vxor.u32 %v818, 2147483648
  %v825 = vsel %vm823, %v817, %v824
  %vm826 = vcmp.eq.s32.totalorder %v821, 2
  %v827 = vxor.u32 %v817, 2147483648
  %v828 = vsel %vm826, %v827, %v818
  %v829 = vsel %vm822, %v825, %v828
  %v830 = vsel %vm819, nan, %v829
  %v831 = vand.u32 2147483647, %v700
  %vm832 = vcmp.le.f32.partialorder %v831, 0.7853982
  %vm833 = vcmp.lt.s32.totalorder %v700, 0
  %v834 = vand.u32 %v700, 2139095040
  %v835 = vshrl.u32 %v834, 23
  %v836 = vsub.s32 %v835, 127
  %v837 = vand.u32 2147483647, %v700
  %v838 = vand.u32 %v837, 8388607
  %v839 = vor.u32 %v838, 8388608
  %v840 = vsub.s32 0, %v839
  %v841 = vadd.s32 %v836, 1
  %vm842 = vcmp.gt.s32.totalorder %v841, 0
  %v843 = vsel %vm842, %v841, 0
  %v844 = vshrl.u32 %v843, 5
  %v845 = vand.u32 %v843, 31
  %v846 = vsub.s32 32, %v845
  %v847 = vshrl.u32 683565275, %v846
  %v848 = vshll.u32 683565275, %v845
  %v849 = vshrl.u32 2475754826, %v846
  %v850 = vor.u32 %v848, %v849
  %v851 = vshll.u32 2475754826, %v845
  %v852 = vshrl.u32 2131351028, %v846
  %v853 = vor.u32 %v851, %v852
  %v854 = vshll.u32 2131351028, %v845
  %v855 = vshrl.u32 2102212464, %v846
  %v856 = vor.u32 %v854, %v855
  %v857 = vshll.u32 2102212464, %v845
  %v858 = vshrl.u32 920167782, %v846
  %v859 = vor.u32 %v857, %v858
  %v860 = vshll.u32 920167782, %v845
  %v861 = vshrl.u32 1326507024, %v846
  %v862 = vor.u32 %v860, %v861
  %vm863 = vcmp.lt.s32.totalorder %v844, 1
  %vm864 = vcmp.lt.s32.totalorder %v844, 2
  %vm865 = vcmp.lt.s32.totalorder %v844, 3
  %vm866 = vcmp.lt.s32.totalorder %v844, 4
  %v867 = vsel %vm863, %v847, %v850
  %v868 = vsel %vm866, %v856, 2102212464
  %v869 = vsel %vm865, %v853, %v868
  %v870 = vsel %vm864, %v867, %v869
  %v871 = vsel %vm863, %v850, %v853
  %v872 = vsel %vm866, %v859, 920167782
  %v873 = vsel %vm865, %v856, %v872
  %v874 = vsel %vm864, %v871, %v873
  %v875 = vsel %vm863, %v853, %v856
  %v876 = vsel %vm866, %v862, 1326507024
  %v877 = vsel %vm865, %v859, %v876
  %v878 = vsel %vm864, %v875, %v877
  %v879 = vshll.u32 %v839, 8
  %v880 = vmul.u32.u64.compose %v879, %v878
  %v881 = vextract.low.u32 %v880
  %v882 = vextract.high.u32 %v880
  %v883 = vmul.u32.u64.compose %v879, %v874
  %v884 = vextract.low.u32 %v883
  %v885 = vextract.high.u32 %v883
  %v886 = vmul.u32 %v879, %v870
  %v887 = vadd.s32 %v882, %v884
  %vm888 = vc.u32 %v882, %v884
  %v889 = vadd.s32 %v885, 1
  %v890 = vsel %vm888, %v889, %v885
  %v891 = vadd.s32 %v886, %v890
  %v892 = vadd.s32 %v891, 536870912
  %v893 = vshrl.u32 %v892, 30
  %v894 = vshll.u32 %v893, 30
  %v895 = vsub.s32 %v891, %v894
  %vm896 = vcmp.lt.s32.totalorder %v895, 0
  %v897 = vsub.s32 0, %v895
  %v898 = vsel %vm896, %v897, %v895
  %v899 = vclz %v898
  %v900 = vsub.s32 %v899, 2
  %vm901 = vcmp.gt.s32.totalorder 0, %v900
  %v902 = vsel %vm901, 0, %v900
  %v903 = vsub.s32 32, %v902
  %v904 = vshll.u32 %v895, %v902
  %v905 = vshrl.u32 %v887, %v903
  %v906 = vor.u32 %v904, %v905
  %v907 = vsub.s32 4294967266, %v902
  %v908 = vadd.s32 %v907, 127
  %v909 = vshll.u32 %v908, 23
  %v910 = vor.u32 4788187, %v909
  %v911 = vand.u32 2147483647, %v910
  %v913 = vcvt.s32.f32 %v906
  %v914 = vmul.f32 %v913, %v911
  %v915 = vxor.u32 %v914, 2147483648
  %v916 = vsel %vm833, %v915, %v914
  %v917 = vsub.s32 4, %v893
  %v918 = vsel %vm833, %v917, %v893
  %v919 = vsel %vm832, %v700, %v916
  %v920 = vsel %vm832, 0, %v918
  %v921 = vcosq.f32.pop %v919
  %v922 = vsinq.f32.pop %v919
  %vm923 = vweird.f32 %v700
  %v924 = vadd.s32 %v920, 3
  %v925 = vand.u32 %v924, 3
  %vm926 = vcmp.lt.s32.totalorder %v925, 2
  %vm927 = vcmp.eq.s32.totalorder %v925, 0
  %v928 = vxor.u32 %v922, 2147483648
  %v929 = vsel %vm927, %v921, %v928
  %vm930 = vcmp.eq.s32.totalorder %v925, 2
  %v931 = vxor.u32 %v921, 2147483648
  %v932 = vsel %vm930, %v931, %v922
  %v933 = vsel %vm926, %v929, %v932
  %v934 = vsel %vm923, nan, %v933
  %v935 = vand.u32 2147483647, %v705
  %vm936 = vcmp.le.f32.partialorder %v935, 0.7853982
  %vm937 = vcmp.lt.s32.totalorder %v705, 0
  %v938 = vand.u32 %v705, 2139095040
  %v939 = vshrl.u32 %v938, 23
  %v940 = vsub.s32 %v939, 127
  %v941 = vand.u32 2147483647, %v705
  %v942 = vand.u32 %v941, 8388607
  %v943 = vor.u32 %v942, 8388608
  %v944 = vsub.s32 0, %v943
  %v945 = vadd.s32 %v940, 1
  %vm946 = vcmp.gt.s32.totalorder %v945, 0
  %v947 = vsel %vm946, %v945, 0
  %v948 = vshrl.u32 %v947, 5
  %v949 = vand.u32 %v947, 31
  %v950 = vsub.s32 32, %v949
  %v951 = vshrl.u32 683565275, %v950
  %v952 = vshll.u32 683565275, %v949
  %v953 = vshrl.u32 2475754826, %v950
  %v954 = vor.u32 %v952, %v953
  %v955 = vshll.u32 2475754826, %v949
  %v956 = vshrl.u32 2131351028, %v950
  %v957 = vor.u32 %v955, %v956
  %v958 = vshll.u32 2131351028, %v949
  %v959 = vshrl.u32 2102212464, %v950
  %v960 = vor.u32 %v958, %v959
  %v961 = vshll.u32 2102212464, %v949
  %v962 = vshrl.u32 920167782, %v950
  %v963 = vor.u32 %v961, %v962
  %v964 = vshll.u32 920167782, %v949
  %v965 = vshrl.u32 1326507024, %v950
  %v966 = vor.u32 %v964, %v965
  %vm967 = vcmp.lt.s32.totalorder %v948, 1
  %vm968 = vcmp.lt.s32.totalorder %v948, 2
  %vm969 = vcmp.lt.s32.totalorder %v948, 3
  %vm970 = vcmp.lt.s32.totalorder %v948, 4
  %v971 = vsel %vm967, %v951, %v954
  %v972 = vsel %vm970, %v960, 2102212464
  %v973 = vsel %vm969, %v957, %v972
  %v974 = vsel %vm968, %v971, %v973
  %v975 = vsel %vm967, %v954, %v957
  %v976 = vsel %vm970, %v963, 920167782
  %v977 = vsel %vm969, %v960, %v976
  %v978 = vsel %vm968, %v975, %v977
  %v979 = vsel %vm967, %v957, %v960
  %v980 = vsel %vm970, %v966, 1326507024
  %v981 = vsel %vm969, %v963, %v980
  %v982 = vsel %vm968, %v979, %v981
  %v983 = vshll.u32 %v943, 8
  %v984 = vmul.u32.u64.compose %v983, %v982
  %v985 = vextract.low.u32 %v984
  %v986 = vextract.high.u32 %v984
  %v987 = vmul.u32.u64.compose %v983, %v978
  %v988 = vextract.low.u32 %v987
  %v989 = vextract.high.u32 %v987
  %v990 = vmul.u32 %v983, %v974
  %v991 = vadd.s32 %v986, %v988
  %vm992 = vc.u32 %v986, %v988
  %v993 = vadd.s32 %v989, 1
  %v994 = vsel %vm992, %v993, %v989
  %v995 = vadd.s32 %v990, %v994
  %v996 = vadd.s32 %v995, 536870912
  %v997 = vshrl.u32 %v996, 30
  %v998 = vshll.u32 %v997, 30
  %v999 = vsub.s32 %v995, %v998
  %vm1000 = vcmp.lt.s32.totalorder %v999, 0
  %v1001 = vsub.s32 0, %v999
  %v1002 = vsel %vm1000, %v1001, %v999
  %v1003 = vclz %v1002
  %v1004 = vsub.s32 %v1003, 2
  %vm1005 = vcmp.gt.s32.totalorder 0, %v1004
  %v1006 = vsel %vm1005, 0, %v1004
  %v1007 = vsub.s32 32, %v1006
  %v1008 = vshll.u32 %v999, %v1006
  %v1009 = vshrl.u32 %v991, %v1007
  %v1010 = vor.u32 %v1008, %v1009
  %v1011 = vsub.s32 4294967266, %v1006
  %v1012 = vadd.s32 %v1011, 127
  %v1013 = vshll.u32 %v1012, 23
  %v1014 = vor.u32 4788187, %v1013
  %v1015 = vand.u32 2147483647, %v1014
  %v1017 = vcvt.s32.f32 %v1010
  %v1018 = vmul.f32 %v1017, %v1015
  %v1019 = vxor.u32 %v1018, 2147483648
  %v1020 = vsel %vm937, %v1019, %v1018
  %v1021 = vsub.s32 4, %v997
  %v1022 = vsel %vm937, %v1021, %v997
  %v1023 = vsel %vm936, %v705, %v1020
  %v1024 = vsel %vm936, 0, %v1022
  %v1025 = vcosq.f32.pop %v1023
  %v1026 = vsinq.f32.pop %v1023
  %vm1027 = vweird.f32 %v705
  %v1028 = vadd.s32 %v1024, 3
  %v1029 = vand.u32 %v1028, 3
  %vm1030 = vcmp.lt.s32.totalorder %v1029, 2
  %vm1031 = vcmp.eq.s32.totalorder %v1029, 0
  %v1032 = vxor.u32 %v1026, 2147483648
  %v1033 = vsel %vm1031, %v1025, %v1032
  %vm1034 = vcmp.eq.s32.totalorder %v1029, 2
  %v1035 = vxor.u32 %v1025, 2147483648
  %v1036 = vsel %vm1034, %v1035, %v1026
  %v1037 = vsel %vm1030, %v1033, %v1036
  %v1038 = vsel %vm1027, nan, %v1037
  %v1039 = vand.u32 2147483647, %v708
  %vm1040 = vcmp.le.f32.partialorder %v1039, 0.7853982
  %vm1041 = vcmp.lt.s32.totalorder %v708, 0
  %v1042 = vand.u32 %v708, 2139095040
  %v1043 = vshrl.u32 %v1042, 23
  %v1044 = vsub.s32 %v1043, 127
  %v1045 = vand.u32 2147483647, %v708
  %v1046 = vand.u32 %v1045, 8388607
  %v1047 = vor.u32 %v1046, 8388608
  %v1048 = vsub.s32 0, %v1047
  %v1049 = vadd.s32 %v1044, 1
  %vm1050 = vcmp.gt.s32.totalorder %v1049, 0
  %v1051 = vsel %vm1050, %v1049, 0
  %v1052 = vshrl.u32 %v1051, 5
  %v1053 = vand.u32 %v1051, 31
  %v1054 = vsub.s32 32, %v1053
  %v1055 = vshrl.u32 683565275, %v1054
  %v1056 = vshll.u32 683565275, %v1053
  %v1057 = vshrl.u32 2475754826, %v1054
  %v1058 = vor.u32 %v1056, %v1057
  %v1059 = vshll.u32 2475754826, %v1053
  %v1060 = vshrl.u32 2131351028, %v1054
  %v1061 = vor.u32 %v1059, %v1060
  %v1062 = vshll.u32 2131351028, %v1053
  %v1063 = vshrl.u32 2102212464, %v1054
  %v1064 = vor.u32 %v1062, %v1063
  %v1065 = vshll.u32 2102212464, %v1053
  %v1066 = vshrl.u32 920167782, %v1054
  %v1067 = vor.u32 %v1065, %v1066
  %v1068 = vshll.u32 920167782, %v1053
  %v1069 = vshrl.u32 1326507024, %v1054
  %v1070 = vor.u32 %v1068, %v1069
  %vm1071 = vcmp.lt.s32.totalorder %v1052, 1
  %vm1072 = vcmp.lt.s32.totalorder %v1052, 2
  %vm1073 = vcmp.lt.s32.totalorder %v1052, 3
  %vm1074 = vcmp.lt.s32.totalorder %v1052, 4
  %v1075 = vsel %vm1071, %v1055, %v1058
  %v1076 = vsel %vm1074, %v1064, 2102212464
  %v1077 = vsel %vm1073, %v1061, %v1076
  %v1078 = vsel %vm1072, %v1075, %v1077
  %v1079 = vsel %vm1071, %v1058, %v1061
  %v1080 = vsel %vm1074, %v1067, 920167782
  %v1081 = vsel %vm1073, %v1064, %v1080
  %v1082 = vsel %vm1072, %v1079, %v1081
  %v1083 = vsel %vm1071, %v1061, %v1064
  %v1084 = vsel %vm1074, %v1070, 1326507024
  %v1085 = vsel %vm1073, %v1067, %v1084
  %v1086 = vsel %vm1072, %v1083, %v1085
  %v1087 = vshll.u32 %v1047, 8
  %v1088 = vmul.u32.u64.compose %v1087, %v1086
  %v1089 = vextract.low.u32 %v1088
  %v1090 = vextract.high.u32 %v1088
  %v1091 = vmul.u32.u64.compose %v1087, %v1082
  %v1092 = vextract.low.u32 %v1091
  %v1093 = vextract.high.u32 %v1091
  %v1094 = vmul.u32 %v1087, %v1078
  %v1095 = vadd.s32 %v1090, %v1092
  %vm1096 = vc.u32 %v1090, %v1092
  %v1097 = vadd.s32 %v1093, 1
  %v1098 = vsel %vm1096, %v1097, %v1093
  %v1099 = vadd.s32 %v1094, %v1098
  %v1100 = vadd.s32 %v1099, 536870912
  %v1101 = vshrl.u32 %v1100, 30
  %v1102 = vshll.u32 %v1101, 30
  %v1103 = vsub.s32 %v1099, %v1102
  %vm1104 = vcmp.lt.s32.totalorder %v1103, 0
  %v1105 = vsub.s32 0, %v1103
  %v1106 = vsel %vm1104, %v1105, %v1103
  %v1107 = vclz %v1106
  %v1108 = vsub.s32 %v1107, 2
  %vm1109 = vcmp.gt.s32.totalorder 0, %v1108
  %v1110 = vsel %vm1109, 0, %v1108
  %v1111 = vsub.s32 32, %v1110
  %v1112 = vshll.u32 %v1103, %v1110
  %v1113 = vshrl.u32 %v1095, %v1111
  %v1114 = vor.u32 %v1112, %v1113
  %v1115 = vsub.s32 4294967266, %v1110
  %v1116 = vadd.s32 %v1115, 127
  %v1117 = vshll.u32 %v1116, 23
  %v1118 = vor.u32 4788187, %v1117
  %v1119 = vand.u32 2147483647, %v1118
  %v1121 = vcvt.s32.f32 %v1114
  %v1122 = vmul.f32 %v1121, %v1119
  %v1123 = vxor.u32 %v1122, 2147483648
  %v1124 = vsel %vm1041, %v1123, %v1122
  %v1125 = vsub.s32 4, %v1101
  %v1126 = vsel %vm1041, %v1125, %v1101
  %v1127 = vsel %vm1040, %v708, %v1124
  %v1128 = vsel %vm1040, 0, %v1126
  %v1129 = vcosq.f32.pop %v1127
  %v1130 = vsinq.f32.pop %v1127
  %vm1131 = vweird.f32 %v708
  %v1132 = vadd.s32 %v1128, 3
  %v1133 = vand.u32 %v1132, 3
  %vm1134 = vcmp.lt.s32.totalorder %v1133, 2
  %vm1135 = vcmp.eq.s32.totalorder %v1133, 0
  %v1136 = vxor.u32 %v1130, 2147483648
  %v1137 = vsel %vm1135, %v1129, %v1136
  %vm1138 = vcmp.eq.s32.totalorder %v1133, 2
  %v1139 = vxor.u32 %v1129, 2147483648
  %v1140 = vsel %vm1138, %v1139, %v1130
  %v1141 = vsel %vm1134, %v1137, %v1140
  %v1142 = vsel %vm1131, nan, %v1141
  %v1143 = vand.u32 2147483647, %v713
  %vm1144 = vcmp.le.f32.partialorder %v1143, 0.7853982
  %vm1145 = vcmp.lt.s32.totalorder %v713, 0
  %v1146 = vand.u32 %v713, 2139095040
  %v1147 = vshrl.u32 %v1146, 23
  %v1148 = vsub.s32 %v1147, 127
  %v1149 = vand.u32 2147483647, %v713
  %v1150 = vand.u32 %v1149, 8388607
  %v1151 = vor.u32 %v1150, 8388608
  %v1152 = vsub.s32 0, %v1151
  %v1153 = vadd.s32 %v1148, 1
  %vm1154 = vcmp.gt.s32.totalorder %v1153, 0
  %v1155 = vsel %vm1154, %v1153, 0
  %v1156 = vshrl.u32 %v1155, 5
  %v1157 = vand.u32 %v1155, 31
  %v1158 = vsub.s32 32, %v1157
  %v1159 = vshrl.u32 683565275, %v1158
  %v1160 = vshll.u32 683565275, %v1157
  %v1161 = vshrl.u32 2475754826, %v1158
  %v1162 = vor.u32 %v1160, %v1161
  %v1163 = vshll.u32 2475754826, %v1157
  %v1164 = vshrl.u32 2131351028, %v1158
  %v1165 = vor.u32 %v1163, %v1164
  %v1166 = vshll.u32 2131351028, %v1157
  %v1167 = vshrl.u32 2102212464, %v1158
  %v1168 = vor.u32 %v1166, %v1167
  %v1169 = vshll.u32 2102212464, %v1157
  %v1170 = vshrl.u32 920167782, %v1158
  %v1171 = vor.u32 %v1169, %v1170
  %v1172 = vshll.u32 920167782, %v1157
  %v1173 = vshrl.u32 1326507024, %v1158
  %v1174 = vor.u32 %v1172, %v1173
  %vm1175 = vcmp.lt.s32.totalorder %v1156, 1
  %vm1176 = vcmp.lt.s32.totalorder %v1156, 2
  %vm1177 = vcmp.lt.s32.totalorder %v1156, 3
  %vm1178 = vcmp.lt.s32.totalorder %v1156, 4
  %v1179 = vsel %vm1175, %v1159, %v1162
  %v1180 = vsel %vm1178, %v1168, 2102212464
  %v1181 = vsel %vm1177, %v1165, %v1180
  %v1182 = vsel %vm1176, %v1179, %v1181
  %v1183 = vsel %vm1175, %v1162, %v1165
  %v1184 = vsel %vm1178, %v1171, 920167782
  %v1185 = vsel %vm1177, %v1168, %v1184
  %v1186 = vsel %vm1176, %v1183, %v1185
  %v1187 = vsel %vm1175, %v1165, %v1168
  %v1188 = vsel %vm1178, %v1174, 1326507024
  %v1189 = vsel %vm1177, %v1171, %v1188
  %v1190 = vsel %vm1176, %v1187, %v1189
  %v1191 = vshll.u32 %v1151, 8
  %v1192 = vmul.u32.u64.compose %v1191, %v1190
  %v1193 = vextract.low.u32 %v1192
  %v1194 = vextract.high.u32 %v1192
  %v1195 = vmul.u32.u64.compose %v1191, %v1186
  %v1196 = vextract.low.u32 %v1195
  %v1197 = vextract.high.u32 %v1195
  %v1198 = vmul.u32 %v1191, %v1182
  %v1199 = vadd.s32 %v1194, %v1196
  %vm1200 = vc.u32 %v1194, %v1196
  %v1201 = vadd.s32 %v1197, 1
  %v1202 = vsel %vm1200, %v1201, %v1197
  %v1203 = vadd.s32 %v1198, %v1202
  %v1204 = vadd.s32 %v1203, 536870912
  %v1205 = vshrl.u32 %v1204, 30
  %v1206 = vshll.u32 %v1205, 30
  %v1207 = vsub.s32 %v1203, %v1206
  %vm1208 = vcmp.lt.s32.totalorder %v1207, 0
  %v1209 = vsub.s32 0, %v1207
  %v1210 = vsel %vm1208, %v1209, %v1207
  %v1211 = vclz %v1210
  %v1212 = vsub.s32 %v1211, 2
  %vm1213 = vcmp.gt.s32.totalorder 0, %v1212
  %v1214 = vsel %vm1213, 0, %v1212
  %v1215 = vsub.s32 32, %v1214
  %v1216 = vshll.u32 %v1207, %v1214
  %v1217 = vshrl.u32 %v1199, %v1215
  %v1218 = vor.u32 %v1216, %v1217
  %v1219 = vsub.s32 4294967266, %v1214
  %v1220 = vadd.s32 %v1219, 127
  %v1221 = vshll.u32 %v1220, 23
  %v1222 = vor.u32 4788187, %v1221
  %v1223 = vand.u32 2147483647, %v1222
  %v1225 = vcvt.s32.f32 %v1218
  %v1226 = vmul.f32 %v1225, %v1223
  %v1227 = vxor.u32 %v1226, 2147483648
  %v1228 = vsel %vm1145, %v1227, %v1226
  %v1229 = vsub.s32 4, %v1205
  %v1230 = vsel %vm1145, %v1229, %v1205
  %v1231 = vsel %vm1144, %v713, %v1228
  %v1232 = vsel %vm1144, 0, %v1230
  %v1233 = vcosq.f32.pop %v1231
  %v1234 = vsinq.f32.pop %v1231
  %vm1235 = vweird.f32 %v713
  %v1236 = vadd.s32 %v1232, 3
  %v1237 = vand.u32 %v1236, 3
  %vm1238 = vcmp.lt.s32.totalorder %v1237, 2
  %vm1239 = vcmp.eq.s32.totalorder %v1237, 0
  %v1240 = vxor.u32 %v1234, 2147483648
  %v1241 = vsel %vm1239, %v1233, %v1240
  %vm1242 = vcmp.eq.s32.totalorder %v1237, 2
  %v1243 = vxor.u32 %v1233, 2147483648
  %v1244 = vsel %vm1242, %v1243, %v1234
  %v1245 = vsel %vm1238, %v1241, %v1244
  %v1246 = vsel %vm1235, nan, %v1245
  %v1247 = vand.u32 2147483647, %v716
  %vm1248 = vcmp.le.f32.partialorder %v1247, 0.7853982
  %vm1249 = vcmp.lt.s32.totalorder %v716, 0
  %v1250 = vand.u32 %v716, 2139095040
  %v1251 = vshrl.u32 %v1250, 23
  %v1252 = vsub.s32 %v1251, 127
  %v1253 = vand.u32 2147483647, %v716
  %v1254 = vand.u32 %v1253, 8388607
  %v1255 = vor.u32 %v1254, 8388608
  %v1256 = vsub.s32 0, %v1255
  %v1257 = vadd.s32 %v1252, 1
  %vm1258 = vcmp.gt.s32.totalorder %v1257, 0
  %v1259 = vsel %vm1258, %v1257, 0
  %v1260 = vshrl.u32 %v1259, 5
  %v1261 = vand.u32 %v1259, 31
  %v1262 = vsub.s32 32, %v1261
  %v1263 = vshrl.u32 683565275, %v1262
  %v1264 = vshll.u32 683565275, %v1261
  %v1265 = vshrl.u32 2475754826, %v1262
  %v1266 = vor.u32 %v1264, %v1265
  %v1267 = vshll.u32 2475754826, %v1261
  %v1268 = vshrl.u32 2131351028, %v1262
  %v1269 = vor.u32 %v1267, %v1268
  %v1270 = vshll.u32 2131351028, %v1261
  %v1271 = vshrl.u32 2102212464, %v1262
  %v1272 = vor.u32 %v1270, %v1271
  %v1273 = vshll.u32 2102212464, %v1261
  %v1274 = vshrl.u32 920167782, %v1262
  %v1275 = vor.u32 %v1273, %v1274
  %v1276 = vshll.u32 920167782, %v1261
  %v1277 = vshrl.u32 1326507024, %v1262
  %v1278 = vor.u32 %v1276, %v1277
  %vm1279 = vcmp.lt.s32.totalorder %v1260, 1
  %vm1280 = vcmp.lt.s32.totalorder %v1260, 2
  %vm1281 = vcmp.lt.s32.totalorder %v1260, 3
  %vm1282 = vcmp.lt.s32.totalorder %v1260, 4
  %v1283 = vsel %vm1279, %v1263, %v1266
  %v1284 = vsel %vm1282, %v1272, 2102212464
  %v1285 = vsel %vm1281, %v1269, %v1284
  %v1286 = vsel %vm1280, %v1283, %v1285
  %v1287 = vsel %vm1279, %v1266, %v1269
  %v1288 = vsel %vm1282, %v1275, 920167782
  %v1289 = vsel %vm1281, %v1272, %v1288
  %v1290 = vsel %vm1280, %v1287, %v1289
  %v1291 = vsel %vm1279, %v1269, %v1272
  %v1292 = vsel %vm1282, %v1278, 1326507024
  %v1293 = vsel %vm1281, %v1275, %v1292
  %v1294 = vsel %vm1280, %v1291, %v1293
  %v1295 = vshll.u32 %v1255, 8
  %v1296 = vmul.u32.u64.compose %v1295, %v1294
  %v1297 = vextract.low.u32 %v1296
  %v1298 = vextract.high.u32 %v1296
  %v1299 = vmul.u32.u64.compose %v1295, %v1290
  %v1300 = vextract.low.u32 %v1299
  %v1301 = vextract.high.u32 %v1299
  %v1302 = vmul.u32 %v1295, %v1286
  %v1303 = vadd.s32 %v1298, %v1300
  %vm1304 = vc.u32 %v1298, %v1300
  %v1305 = vadd.s32 %v1301, 1
  %v1306 = vsel %vm1304, %v1305, %v1301
  %v1307 = vadd.s32 %v1302, %v1306
  %v1308 = vadd.s32 %v1307, 536870912
  %v1309 = vshrl.u32 %v1308, 30
  %v1310 = vshll.u32 %v1309, 30
  %v1311 = vsub.s32 %v1307, %v1310
  %vm1312 = vcmp.lt.s32.totalorder %v1311, 0
  %v1313 = vsub.s32 0, %v1311
  %v1314 = vsel %vm1312, %v1313, %v1311
  %v1315 = vclz %v1314
  %v1316 = vsub.s32 %v1315, 2
  %vm1317 = vcmp.gt.s32.totalorder 0, %v1316
  %v1318 = vsel %vm1317, 0, %v1316
  %v1319 = vsub.s32 32, %v1318
  %v1320 = vshll.u32 %v1311, %v1318
  %v1321 = vshrl.u32 %v1303, %v1319
  %v1322 = vor.u32 %v1320, %v1321
  %v1323 = vsub.s32 4294967266, %v1318
  %v1324 = vadd.s32 %v1323, 127
  %v1325 = vshll.u32 %v1324, 23
  %v1326 = vor.u32 4788187, %v1325
  %v1327 = vand.u32 2147483647, %v1326
  %v1329 = vcvt.s32.f32 %v1322
  %v1330 = vmul.f32 %v1329, %v1327
  %v1331 = vxor.u32 %v1330, 2147483648
  %v1332 = vsel %vm1249, %v1331, %v1330
  %v1333 = vsub.s32 4, %v1309
  %v1334 = vsel %vm1249, %v1333, %v1309
  %v1335 = vsel %vm1248, %v716, %v1332
  %v1336 = vsel %vm1248, 0, %v1334
  %v1337 = vcosq.f32.pop %v1335
  %v1338 = vsinq.f32.pop %v1335
  %vm1339 = vweird.f32 %v716
  %v1340 = vadd.s32 %v1336, 3
  %v1341 = vand.u32 %v1340, 3
  %vm1342 = vcmp.lt.s32.totalorder %v1341, 2
  %vm1343 = vcmp.eq.s32.totalorder %v1341, 0
  %v1344 = vxor.u32 %v1338, 2147483648
  %v1345 = vsel %vm1343, %v1337, %v1344
  %vm1346 = vcmp.eq.s32.totalorder %v1341, 2
  %v1347 = vxor.u32 %v1337, 2147483648
  %v1348 = vsel %vm1346, %v1347, %v1338
  %v1349 = vsel %vm1342, %v1345, %v1348
  %v1350 = vsel %vm1339, nan, %v1349
  %v1351 = vand.u32 2147483647, %v721
  %vm1352 = vcmp.le.f32.partialorder %v1351, 0.7853982
  %vm1353 = vcmp.lt.s32.totalorder %v721, 0
  %v1354 = vand.u32 %v721, 2139095040
  %v1355 = vshrl.u32 %v1354, 23
  %v1356 = vsub.s32 %v1355, 127
  %v1357 = vand.u32 2147483647, %v721
  %v1358 = vand.u32 %v1357, 8388607
  %v1359 = vor.u32 %v1358, 8388608
  %v1360 = vsub.s32 0, %v1359
  %v1361 = vadd.s32 %v1356, 1
  %vm1362 = vcmp.gt.s32.totalorder %v1361, 0
  %v1363 = vsel %vm1362, %v1361, 0
  %v1364 = vshrl.u32 %v1363, 5
  %v1365 = vand.u32 %v1363, 31
  %v1366 = vsub.s32 32, %v1365
  %v1367 = vshrl.u32 683565275, %v1366
  %v1368 = vshll.u32 683565275, %v1365
  %v1369 = vshrl.u32 2475754826, %v1366
  %v1370 = vor.u32 %v1368, %v1369
  %v1371 = vshll.u32 2475754826, %v1365
  %v1372 = vshrl.u32 2131351028, %v1366
  %v1373 = vor.u32 %v1371, %v1372
  %v1374 = vshll.u32 2131351028, %v1365
  %v1375 = vshrl.u32 2102212464, %v1366
  %v1376 = vor.u32 %v1374, %v1375
  %v1377 = vshll.u32 2102212464, %v1365
  %v1378 = vshrl.u32 920167782, %v1366
  %v1379 = vor.u32 %v1377, %v1378
  %v1380 = vshll.u32 920167782, %v1365
  %v1381 = vshrl.u32 1326507024, %v1366
  %v1382 = vor.u32 %v1380, %v1381
  %vm1383 = vcmp.lt.s32.totalorder %v1364, 1
  %vm1384 = vcmp.lt.s32.totalorder %v1364, 2
  %vm1385 = vcmp.lt.s32.totalorder %v1364, 3
  %vm1386 = vcmp.lt.s32.totalorder %v1364, 4
  %v1387 = vsel %vm1383, %v1367, %v1370
  %v1388 = vsel %vm1386, %v1376, 2102212464
  %v1389 = vsel %vm1385, %v1373, %v1388
  %v1390 = vsel %vm1384, %v1387, %v1389
  %v1391 = vsel %vm1383, %v1370, %v1373
  %v1392 = vsel %vm1386, %v1379, 920167782
  %v1393 = vsel %vm1385, %v1376, %v1392
  %v1394 = vsel %vm1384, %v1391, %v1393
  %v1395 = vsel %vm1383, %v1373, %v1376
  %v1396 = vsel %vm1386, %v1382, 1326507024
  %v1397 = vsel %vm1385, %v1379, %v1396
  %v1398 = vsel %vm1384, %v1395, %v1397
  %v1399 = vshll.u32 %v1359, 8
  %v1400 = vmul.u32.u64.compose %v1399, %v1398
  %v1401 = vextract.low.u32 %v1400
  %v1402 = vextract.high.u32 %v1400
  %v1403 = vmul.u32.u64.compose %v1399, %v1394
  %v1404 = vextract.low.u32 %v1403
  %v1405 = vextract.high.u32 %v1403
  %v1406 = vmul.u32 %v1399, %v1390
  %v1407 = vadd.s32 %v1402, %v1404
  %vm1408 = vc.u32 %v1402, %v1404
  %v1409 = vadd.s32 %v1405, 1
  %v1410 = vsel %vm1408, %v1409, %v1405
  %v1411 = vadd.s32 %v1406, %v1410
  %v1412 = vadd.s32 %v1411, 536870912
  %v1413 = vshrl.u32 %v1412, 30
  %v1414 = vshll.u32 %v1413, 30
  %v1415 = vsub.s32 %v1411, %v1414
  %vm1416 = vcmp.lt.s32.totalorder %v1415, 0
  %v1417 = vsub.s32 0, %v1415
  %v1418 = vsel %vm1416, %v1417, %v1415
  %v1419 = vclz %v1418
  %v1420 = vsub.s32 %v1419, 2
  %vm1421 = vcmp.gt.s32.totalorder 0, %v1420
  %v1422 = vsel %vm1421, 0, %v1420
  %v1423 = vsub.s32 32, %v1422
  %v1424 = vshll.u32 %v1415, %v1422
  %v1425 = vshrl.u32 %v1407, %v1423
  %v1426 = vor.u32 %v1424, %v1425
  %v1427 = vsub.s32 4294967266, %v1422
  %v1428 = vadd.s32 %v1427, 127
  %v1429 = vshll.u32 %v1428, 23
  %v1430 = vor.u32 4788187, %v1429
  %v1431 = vand.u32 2147483647, %v1430
  %v1433 = vcvt.s32.f32 %v1426
  %v1434 = vmul.f32 %v1433, %v1431
  %v1435 = vxor.u32 %v1434, 2147483648
  %v1436 = vsel %vm1353, %v1435, %v1434
  %v1437 = vsub.s32 4, %v1413
  %v1438 = vsel %vm1353, %v1437, %v1413
  %v1439 = vsel %vm1352, %v721, %v1436
  %v1440 = vsel %vm1352, 0, %v1438
  %v1441 = vcosq.f32.pop %v1439
  %v1442 = vsinq.f32.pop %v1439
  %vm1443 = vweird.f32 %v721
  %v1444 = vadd.s32 %v1440, 3
  %v1445 = vand.u32 %v1444, 3
  %vm1446 = vcmp.lt.s32.totalorder %v1445, 2
  %vm1447 = vcmp.eq.s32.totalorder %v1445, 0
  %v1448 = vxor.u32 %v1442, 2147483648
  %v1449 = vsel %vm1447, %v1441, %v1448
  %vm1450 = vcmp.eq.s32.totalorder %v1445, 2
  %v1451 = vxor.u32 %v1441, 2147483648
  %v1452 = vsel %vm1450, %v1451, %v1442
  %v1453 = vsel %vm1446, %v1449, %v1452
  %v1454 = vsel %vm1443, nan, %v1453
  %v1455 = vand.u32 2147483647, %v724
  %vm1456 = vcmp.le.f32.partialorder %v1455, 0.7853982
  %vm1457 = vcmp.lt.s32.totalorder %v724, 0
  %v1458 = vand.u32 %v724, 2139095040
  %v1459 = vshrl.u32 %v1458, 23
  %v1460 = vsub.s32 %v1459, 127
  %v1461 = vand.u32 2147483647, %v724
  %v1462 = vand.u32 %v1461, 8388607
  %v1463 = vor.u32 %v1462, 8388608
  %v1464 = vsub.s32 0, %v1463
  %v1465 = vadd.s32 %v1460, 1
  %vm1466 = vcmp.gt.s32.totalorder %v1465, 0
  %v1467 = vsel %vm1466, %v1465, 0
  %v1468 = vshrl.u32 %v1467, 5
  %v1469 = vand.u32 %v1467, 31
  %v1470 = vsub.s32 32, %v1469
  %v1471 = vshrl.u32 683565275, %v1470
  %v1472 = vshll.u32 683565275, %v1469
  %v1473 = vshrl.u32 2475754826, %v1470
  %v1474 = vor.u32 %v1472, %v1473
  %v1475 = vshll.u32 2475754826, %v1469
  %v1476 = vshrl.u32 2131351028, %v1470
  %v1477 = vor.u32 %v1475, %v1476
  %v1478 = vshll.u32 2131351028, %v1469
  %v1479 = vshrl.u32 2102212464, %v1470
  %v1480 = vor.u32 %v1478, %v1479
  %v1481 = vshll.u32 2102212464, %v1469
  %v1482 = vshrl.u32 920167782, %v1470
  %v1483 = vor.u32 %v1481, %v1482
  %v1484 = vshll.u32 920167782, %v1469
  %v1485 = vshrl.u32 1326507024, %v1470
  %v1486 = vor.u32 %v1484, %v1485
  %vm1487 = vcmp.lt.s32.totalorder %v1468, 1
  %vm1488 = vcmp.lt.s32.totalorder %v1468, 2
  %vm1489 = vcmp.lt.s32.totalorder %v1468, 3
  %vm1490 = vcmp.lt.s32.totalorder %v1468, 4
  %v1491 = vsel %vm1487, %v1471, %v1474
  %v1492 = vsel %vm1490, %v1480, 2102212464
  %v1493 = vsel %vm1489, %v1477, %v1492
  %v1494 = vsel %vm1488, %v1491, %v1493
  %v1495 = vsel %vm1487, %v1474, %v1477
  %v1496 = vsel %vm1490, %v1483, 920167782
  %v1497 = vsel %vm1489, %v1480, %v1496
  %v1498 = vsel %vm1488, %v1495, %v1497
  %v1499 = vsel %vm1487, %v1477, %v1480
  %v1500 = vsel %vm1490, %v1486, 1326507024
  %v1501 = vsel %vm1489, %v1483, %v1500
  %v1502 = vsel %vm1488, %v1499, %v1501
  %v1503 = vshll.u32 %v1463, 8
  %v1504 = vmul.u32.u64.compose %v1503, %v1502
  %v1505 = vextract.low.u32 %v1504
  %v1506 = vextract.high.u32 %v1504
  %v1507 = vmul.u32.u64.compose %v1503, %v1498
  %v1508 = vextract.low.u32 %v1507
  %v1509 = vextract.high.u32 %v1507
  %v1510 = vmul.u32 %v1503, %v1494
  %v1511 = vadd.s32 %v1506, %v1508
  %vm1512 = vc.u32 %v1506, %v1508
  %v1513 = vadd.s32 %v1509, 1
  %v1514 = vsel %vm1512, %v1513, %v1509
  %v1515 = vadd.s32 %v1510, %v1514
  %v1516 = vadd.s32 %v1515, 536870912
  %v1517 = vshrl.u32 %v1516, 30
  %v1518 = vshll.u32 %v1517, 30
  %v1519 = vsub.s32 %v1515, %v1518
  %vm1520 = vcmp.lt.s32.totalorder %v1519, 0
  %v1521 = vsub.s32 0, %v1519
  %v1522 = vsel %vm1520, %v1521, %v1519
  %v1523 = vclz %v1522
  %v1524 = vsub.s32 %v1523, 2
  %vm1525 = vcmp.gt.s32.totalorder 0, %v1524
  %v1526 = vsel %vm1525, 0, %v1524
  %v1527 = vsub.s32 32, %v1526
  %v1528 = vshll.u32 %v1519, %v1526
  %v1529 = vshrl.u32 %v1511, %v1527
  %v1530 = vor.u32 %v1528, %v1529
  %v1531 = vsub.s32 4294967266, %v1526
  %v1532 = vadd.s32 %v1531, 127
  %v1533 = vshll.u32 %v1532, 23
  %v1534 = vor.u32 4788187, %v1533
  %v1535 = vand.u32 2147483647, %v1534
  %v1537 = vcvt.s32.f32 %v1530
  %v1538 = vmul.f32 %v1537, %v1535
  %v1539 = vxor.u32 %v1538, 2147483648
  %v1540 = vsel %vm1457, %v1539, %v1538
  %v1541 = vsub.s32 4, %v1517
  %v1542 = vsel %vm1457, %v1541, %v1517
  %v1543 = vsel %vm1456, %v724, %v1540
  %v1544 = vsel %vm1456, 0, %v1542
  %v1545 = vcosq.f32.pop %v1543
  %v1546 = vsinq.f32.pop %v1543
  %vm1547 = vweird.f32 %v724
  %v1548 = vadd.s32 %v1544, 3
  %v1549 = vand.u32 %v1548, 3
  %vm1550 = vcmp.lt.s32.totalorder %v1549, 2
  %vm1551 = vcmp.eq.s32.totalorder %v1549, 0
  %v1552 = vxor.u32 %v1546, 2147483648
  %v1553 = vsel %vm1551, %v1545, %v1552
  %vm1554 = vcmp.eq.s32.totalorder %v1549, 2
  %v1555 = vxor.u32 %v1545, 2147483648
  %v1556 = vsel %vm1554, %v1555, %v1546
  %v1557 = vsel %vm1550, %v1553, %v1556
  %v1558 = vsel %vm1547, nan, %v1557
  %1559 = vst [vmem:[%s4] sm:$0xff] %v830
  %1560 = vst [vmem:[%s4 + $0x8] sm:$0xff] %v934
  %1561 = vst [vmem:[%s4 + $0x10] sm:$0xff] %v1038
  %1562 = vst [vmem:[%s4 + $0x18] sm:$0xff] %v1142
  %1563 = vst [vmem:[%s4 + $0x20] sm:$0xff] %v1246
  %1564 = vst [vmem:[%s4 + $0x28] sm:$0xff] %v1350
  %1565 = vst [vmem:[%s4 + $0x30] sm:$0xff] %v1454
  %1566 = vst [vmem:[%s4 + $0x38] sm:$0xff] %v1558
  // Predicated region
  $region22: #{ssm_forward.1} parent=0 // pred_check
    _
  $region23: #{ssm_forward.1} parent=0 // pred_check_branch
    %1568 = sbr.rel (0) target = $region25
  $region24: #{ssm_forward.1} parent=0 // pred_region
    _
  $region25: #{ssm_forward.1} parent=0 // pred_fallthru
    _
  // Predicated region
  $region26: #{ssm_forward.1} parent=0 // pred_check
    _
  $region27: #{ssm_forward.1} parent=0 // pred_check_branch
    %1570 = sbr.rel (0) target = $region29
  $region28: #{ssm_forward.1} parent=0 // pred_region
    _
  $region29: #{ssm_forward.1} parent=0 // pred_fallthru
    _

</llo_original>
